<compile_context>
chip_gen: v6e
topology: v6e:2x2x1
jax: 0.10.0
libtpu: 0.0.40
codegen_flags: <defaults>
</compile_context>

<pallas_src>
import math
import numpy as np
import jax
import jax.numpy as jnp
from jax import lax
from jax.experimental import pallas as pl
from jax.experimental.pallas import tpu as pltpu

HIDDEN = 128  # fixed by the module


def _round_up(n, m):
    return ((n + m - 1) // m) * m


def _lstm_kernel(x_ref, h0_ref, c0_ref, wih_ref, whh_ref, b_ref,
                 wdec_ref, bdec_ref,
                 logits_ref, hn_ref, cn_ref):
    """Single-invocation kernel: whole sequence, whole (padded) batch.

    x_ref   : (T*Bp, Dp)  f32   time-major, batch- and feature-padded
    h0/c0   : (Bp, H)     f32
    wih_ref : (Dp, 4H)    bf16  W_ih^T (zero-padded rows; i/f/o cols pre-scaled by 0.5)
    whh_ref : (H, 4H)     bf16  W_hh^T (i/f/o cols pre-scaled by 0.5)
    b_ref   : (Bp, 4H)    f32   broadcast(b_ih + b_hh) (i/f/o cols pre-scaled by 0.5)
    wdec_ref: (H, Sp)     bf16  W_dec^T (zero-padded cols)
    bdec_ref: (1, Sp)     f32
    """
    Bp, H = h0_ref.shape
    T = x_ref.shape[0] // Bp

    def _sigmoid_prescaled(v):
        # i/f/o weight/bias columns already carry the 0.5 factor, so
        # sigmoid(x) = 0.5*tanh(0.5*x) + 0.5 == 0.5*tanh(v) + 0.5  (1 EUP op,
        # no 0.5*v multiply on the dependent path).
        return 0.5 * jnp.tanh(v) + 0.5

    def step(t, carry):
        h, c = carry                                   # f32 (Bp, H)
        row = pl.multiple_of(t * Bp, Bp)               # sublane-aligned slice
        # Re-load weights each unrolled step: avoids pinning ~64 vregs of bf16
        # weights across the recurrence (spill vst/vld would land directly on
        # the serial critical path).  These loads are off the dependency chain.
        wih = wih_ref[...]
        whh = whh_ref[...]
        x_t = x_ref[pl.ds(row, Bp), :].astype(jnp.bfloat16)
        # (x_t @ W_ih^T + b) has no dependence on the previous step -> it
        # issues in the latency shadow of step t-1; only h @ W_hh^T plus the
        # final add is on the serial chain.
        gx = jnp.dot(x_t, wih, preferred_element_type=jnp.float32) + b_ref[...]
        gates = gx + jnp.dot(h.astype(jnp.bfloat16), whh,
                             preferred_element_type=jnp.float32)
        i_g = _sigmoid_prescaled(gates[:, 0 * H:1 * H])
        f_g = _sigmoid_prescaled(gates[:, 1 * H:2 * H])
        g_g = jnp.tanh(gates[:, 2 * H:3 * H])
        o_g = _sigmoid_prescaled(gates[:, 3 * H:4 * H])
        c_new = f_g * c + i_g * g_g
        # h/c carried in f32 (v5e has no bf16 VPU/EUP); the only down-cast on
        # the chain is the per-step h -> bf16 feeding the MXU.
        h_new = o_g * jnp.tanh(c_new)
        return (h_new, c_new)

    # TODO(synk): further chip-specific wins per review: keep W_hh^T resident
    # in the MXU across steps via pltpu.matmul_push_rhs / matmul_acc_lhs /
    # matmul_pop (2x(128,256) column tiles on v6e/v7x, 4x(128,128) on v5e) and
    # on v7x accumulate the x- and h-projections in the MRB; kept on the
    # portable jnp.dot path here.
    h_fin, c_fin = lax.fori_loop(
        0, T, step, (h0_ref[...], c0_ref[...]), unroll=True)

    # Decoder on the last hidden state (lane-dense padded output, unmasked vst).
    logits_ref[...] = (
        jnp.dot(h_fin.astype(jnp.bfloat16), wdec_ref[...],
                preferred_element_type=jnp.float32)
        + bdec_ref[...]
    )
    hn_ref[...] = h_fin
    cn_ref[...] = c_fin


def lstm_sequence_model(x, params, hidden=None):
    """x: (B, T, D_in) float32.  Returns (logits (B, S), (h_n (1,B,128), c_n (1,B,128)))."""
    B, T, D_in = x.shape
    S = params["w_dec"].shape[0]
    H = HIDDEN

    Bp = _round_up(max(B, 8), 8)      # full f32 sublane tile (grow Bp before any grid axis)
    Dp = _round_up(D_in, 128)         # lane-dense x / W_ih rows
    Sp = _round_up(S, 128)            # lane-dense decoder output

    if hidden is None:
        h0 = jnp.zeros((Bp, H), jnp.float32)
        c0 = jnp.zeros((Bp, H), jnp.float32)
    else:
        h0 = jnp.zeros((Bp, H), jnp.float32).at[:B].set(
            hidden[0].reshape(B, H).astype(jnp.float32))
        c0 = jnp.zeros((Bp, H), jnp.float32).at[:B].set(
            hidden[1].reshape(B, H).astype(jnp.float32))

    # time-major, pad batch -> Bp and features -> Dp, flatten (T, Bp) -> rows.
    # x stays f32 so per-step 8-row slices are exactly one (8,128) f32 tile.
    x_tm = jnp.transpose(x, (1, 0, 2))                                   # (T, B, D_in)
    x_pad = jnp.zeros((T, Bp, Dp), jnp.float32).at[:, :B, :D_in].set(x_tm)
    x_flat = x_pad.reshape(T * Bp, Dp)

    # Gate pre-scaling: scale the i/f/o columns of W_ih^T, W_hh^T and the fused
    # bias by 0.5 (exact power of two -> no accuracy change) so the in-kernel
    # sigmoid needs no 0.5*v multiply.  One-time transform; constant-folds
    # under jit because params are closed over as constants.
    gate_scale = jnp.concatenate([
        jnp.full((H,), 0.5, jnp.float32),   # i
        jnp.full((H,), 0.5, jnp.float32),   # f
        jnp.ones((H,), jnp.float32),        # g
        jnp.full((H,), 0.5, jnp.float32),   # o
    ])

    wih_t = (jnp.zeros((Dp, 4 * H), jnp.float32).at[:D_in].set(params["w_ih"].T)
             * gate_scale[None, :]).astype(jnp.bfloat16)                 # (Dp, 4H)
    whh_t = (params["w_hh"].T.astype(jnp.float32)
             * gate_scale[None, :]).astype(jnp.bfloat16)                 # (H, 4H)
    bias = jnp.broadcast_to(
        ((params["b_ih"] + params["b_hh"]).astype(jnp.float32)
         * gate_scale)[None, :], (Bp, 4 * H))                            # (Bp, 4H)
    wdec_t = jnp.zeros((H, Sp), jnp.float32).at[:, :S].set(
        params["w_dec"].T).astype(jnp.bfloat16)                          # (H, Sp)
    bdec = jnp.zeros((1, Sp), jnp.float32).at[:, :S].set(
        params["b_dec"].astype(jnp.float32))

    vmem_spec = pl.BlockSpec(memory_space=pltpu.MemorySpace.VMEM)

    # TODO(synk): PackedSequence / variable-length inputs are not modeled;
    # dense batch_first input is assumed (the non-packed path of the module).
    # TODO(synk): for large B (esp. on v7x 2-TC), add a leading batch-block
    # grid axis with dimension_semantics=("parallel",); at B=2 it would only
    # add per-step grid overhead.  Likewise, T-chunk the x input via
    # pltpu.emit_pipeline once T*Bp no longer trivially fits VMEM.
    logits_p, h_n_p, c_n_p = pl.pallas_call(
        _lstm_kernel,
        out_shape=(
            jax.ShapeDtypeStruct((Bp, Sp), jnp.float32),
            jax.ShapeDtypeStruct((Bp, H), jnp.float32),
            jax.ShapeDtypeStruct((Bp, H), jnp.float32),
        ),
        in_specs=[vmem_spec] * 8,
        out_specs=(vmem_spec, vmem_spec, vmem_spec),
    )(x_flat, h0, c0, wih_t, whh_t, bias, wdec_t, bdec)

    logits = logits_p[:B, :S]
    h_n = h_n_p[:B, :][None, :, :]
    c_n = c_n_p[:B, :][None, :, :]
    return logits, (h_n, c_n)


def init_params(key, num_features, song_library_size):
    """Deterministic init matching nn.LSTM / nn.Linear shapes (uniform +-1/sqrt(H))."""
    d_in = song_library_size + num_features
    k_lstm = 1.0 / math.sqrt(HIDDEN)
    k_dec = 1.0 / math.sqrt(HIDDEN)
    ks = jax.random.split(key, 6)
    return {
        "w_ih": jax.random.uniform(ks[0], (4 * HIDDEN, d_in), jnp.float32, -k_lstm, k_lstm),
        "w_hh": jax.random.uniform(ks[1], (4 * HIDDEN, HIDDEN), jnp.float32, -k_lstm, k_lstm),
        "b_ih": jax.random.uniform(ks[2], (4 * HIDDEN,), jnp.float32, -k_lstm, k_lstm),
        "b_hh": jax.random.uniform(ks[3], (4 * HIDDEN,), jnp.float32, -k_lstm, k_lstm),
        "w_dec": jax.random.uniform(ks[4], (song_library_size, HIDDEN), jnp.float32, -k_dec, k_dec),
        "b_dec": jax.random.uniform(ks[5], (song_library_size,), jnp.float32, -k_dec, k_dec),
    }


def _reference(x, params):
    """Pure-JAX f32 reference (PyTorch LSTM semantics) for validation."""
    B = x.shape[0]
    h = jnp.zeros((B, HIDDEN), jnp.float32)
    c = jnp.zeros((B, HIDDEN), jnp.float32)

    def step(carry, x_t):
        h, c = carry
        gates = (x_t @ params["w_ih"].T + params["b_ih"]
                 + h @ params["w_hh"].T + params["b_hh"])
        i = jax.nn.sigmoid(gates[:, 0 * HIDDEN:1 * HIDDEN])
        f = jax.nn.sigmoid(gates[:, 1 * HIDDEN:2 * HIDDEN])
        g = jnp.tanh(gates[:, 2 * HIDDEN:3 * HIDDEN])
        o = jax.nn.sigmoid(gates[:, 3 * HIDDEN:4 * HIDDEN])
        c = f * c + i * g
        h = o * jnp.tanh(c)
        return (h, c), h

    (h, c), _ = lax.scan(step, (h, c), jnp.transpose(x, (1, 0, 2)))
    logits = h @ params["w_dec"].T + params["b_dec"]
    return logits, h, c


if __name__ == "__main__":
    num_features = 16
    song_library_size = 64
    B, T = 2, 8
    D_in = song_library_size + num_features  # 80

    key = jax.random.PRNGKey(0)
    k_params, k_x = jax.random.split(key)
    params = init_params(k_params, num_features, song_library_size)
    x = jax.random.normal(k_x, (B, T, D_in), jnp.float32)

    fwd = jax.jit(lambda xx: lstm_sequence_model(xx, params, hidden=None))
    logits, (h_n, c_n) = fwd(x)
    jax.block_until_ready((logits, h_n, c_n))

    ref_logits, ref_h, ref_c = _reference(x, params)
    # Tolerance loosened vs pure-f32 (2e-2) because MXU operands are bf16
    # (f32 accumulation + f32 carried state).
    np.testing.assert_allclose(np.asarray(logits), np.asarray(ref_logits), rtol=2e-2, atol=2e-2)
    np.testing.assert_allclose(np.asarray(h_n[0]), np.asarray(ref_h), rtol=2e-2, atol=2e-2)
    np.testing.assert_allclose(np.asarray(c_n[0]), np.asarray(ref_c), rtol=2e-2, atol=2e-2)

    print("KERNEL_OK")
</pallas_src>

<mosaic_0001>
module attributes {stable_mosaic.version = 11 : i64} {
  func.func @_lstm_kernel(%arg0: memref<64x128xf32, #tpu.memory_space<vmem>>, %arg1: memref<8x128xf32, #tpu.memory_space<vmem>>, %arg2: memref<8x128xf32, #tpu.memory_space<vmem>>, %arg3: memref<128x512xbf16, #tpu.memory_space<vmem>>, %arg4: memref<128x512xbf16, #tpu.memory_space<vmem>>, %arg5: memref<8x512xf32, #tpu.memory_space<vmem>>, %arg6: memref<128x128xbf16, #tpu.memory_space<vmem>>, %arg7: memref<1x128xf32, #tpu.memory_space<vmem>>, %arg8: memref<8x128xf32, #tpu.memory_space<vmem>>, %arg9: memref<8x128xf32, #tpu.memory_space<vmem>>, %arg10: memref<8x128xf32, #tpu.memory_space<vmem>>) attributes {dimension_semantics = [], scalar_prefetch = 0 : i64, scratch_operands = 0 : i64, tpu.core_type = #tpu.core_type<tc>} {
    %c0 = arith.constant 0 : index
    %c0_0 = arith.constant 0 : index
    %0 = vector.load %arg1[%c0, %c0_0] : memref<8x128xf32, #tpu.memory_space<vmem>>, vector<8x128xf32>
    %c0_1 = arith.constant 0 : index
    %c0_2 = arith.constant 0 : index
    %1 = vector.load %arg2[%c0_1, %c0_2] : memref<8x128xf32, #tpu.memory_space<vmem>>, vector<8x128xf32>
    %c0_i32 = arith.constant 0 : i32
    %c8_i32 = arith.constant 8 : i32
    %2 = arith.muli %c0_i32, %c8_i32 : i32
    %3 = tpu.assume_multiple %2, 8 : i32
    %c0_3 = arith.constant 0 : index
    %c0_4 = arith.constant 0 : index
    %4 = vector.load %arg3[%c0_3, %c0_4] : memref<128x512xbf16, #tpu.memory_space<vmem>>, vector<128x512xbf16>
    %c0_5 = arith.constant 0 : index
    %c0_6 = arith.constant 0 : index
    %5 = vector.load %arg4[%c0_5, %c0_6] : memref<128x512xbf16, #tpu.memory_space<vmem>>, vector<128x512xbf16>
    %6 = arith.index_cast %3 : i32 to index
    %c0_7 = arith.constant 0 : index
    %7 = vector.load %arg0[%6, %c0_7] : memref<64x128xf32, #tpu.memory_space<vmem>>, vector<8x128xf32>
    %8 = arith.truncf %7 : vector<8x128xf32> to vector<8x128xbf16>
    %cst = arith.constant dense<0.000000e+00> : vector<8x512xf32>
    %9 = tpu.matmul %8, %4, %cst {dimension_numbers = #tpu.dot_dimension_numbers<[1], [0], [0], [1], [0, 0, 1, 1], [], []>} : vector<8x128xbf16>, vector<128x512xbf16>, vector<8x512xf32> -> vector<8x512xf32>
    %c0_8 = arith.constant 0 : index
    %c0_9 = arith.constant 0 : index
    %10 = vector.load %arg5[%c0_8, %c0_9] : memref<8x512xf32, #tpu.memory_space<vmem>>, vector<8x512xf32>
    %11 = arith.addf %9, %10 : vector<8x512xf32>
    %12 = arith.truncf %0 : vector<8x128xf32> to vector<8x128xbf16>
    %cst_10 = arith.constant dense<0.000000e+00> : vector<8x512xf32>
    %13 = tpu.matmul %12, %5, %cst_10 {dimension_numbers = #tpu.dot_dimension_numbers<[1], [0], [0], [1], [0, 0, 1, 1], [], []>} : vector<8x128xbf16>, vector<128x512xbf16>, vector<8x512xf32> -> vector<8x512xf32>
    %14 = arith.addf %11, %13 : vector<8x512xf32>
    %15 = vector.extract_strided_slice %14 {offsets = [0, 0], sizes = [8, 128], strides = [1, 1]} : vector<8x512xf32> to vector<8x128xf32>
    %16 = math.tanh %15 : vector<8x128xf32>
    %cst_11 = arith.constant 5.000000e-01 : f32
    %17 = vector.broadcast %cst_11 : f32 to vector<8x128xf32>
    %18 = arith.mulf %17, %16 : vector<8x128xf32>
    %cst_12 = arith.constant 5.000000e-01 : f32
    %19 = vector.broadcast %cst_12 : f32 to vector<8x128xf32>
    %20 = arith.addf %18, %19 : vector<8x128xf32>
    %21 = vector.extract_strided_slice %14 {offsets = [0, 128], sizes = [8, 128], strides = [1, 1]} : vector<8x512xf32> to vector<8x128xf32>
    %22 = math.tanh %21 : vector<8x128xf32>
    %cst_13 = arith.constant 5.000000e-01 : f32
    %23 = vector.broadcast %cst_13 : f32 to vector<8x128xf32>
    %24 = arith.mulf %23, %22 : vector<8x128xf32>
    %cst_14 = arith.constant 5.000000e-01 : f32
    %25 = vector.broadcast %cst_14 : f32 to vector<8x128xf32>
    %26 = arith.addf %24, %25 : vector<8x128xf32>
    %27 = vector.extract_strided_slice %14 {offsets = [0, 256], sizes = [8, 128], strides = [1, 1]} : vector<8x512xf32> to vector<8x128xf32>
    %28 = math.tanh %27 : vector<8x128xf32>
    %29 = vector.extract_strided_slice %14 {offsets = [0, 384], sizes = [8, 128], strides = [1, 1]} : vector<8x512xf32> to vector<8x128xf32>
    %30 = math.tanh %29 : vector<8x128xf32>
    %cst_15 = arith.constant 5.000000e-01 : f32
    %31 = vector.broadcast %cst_15 : f32 to vector<8x128xf32>
    %32 = arith.mulf %31, %30 : vector<8x128xf32>
    %cst_16 = arith.constant 5.000000e-01 : f32
    %33 = vector.broadcast %cst_16 : f32 to vector<8x128xf32>
    %34 = arith.addf %32, %33 : vector<8x128xf32>
    %35 = arith.mulf %26, %1 : vector<8x128xf32>
    %36 = arith.mulf %20, %28 : vector<8x128xf32>
    %37 = arith.addf %35, %36 : vector<8x128xf32>
    %38 = math.tanh %37 : vector<8x128xf32>
    %39 = arith.mulf %34, %38 : vector<8x128xf32>
    %c1_i32 = arith.constant 1 : i32
    %c8_i32_17 = arith.constant 8 : i32
    %40 = arith.muli %c1_i32, %c8_i32_17 : i32
    %41 = tpu.assume_multiple %40, 8 : i32
    %c0_18 = arith.constant 0 : index
    %c0_19 = arith.constant 0 : index
    %42 = vector.load %arg3[%c0_18, %c0_19] : memref<128x512xbf16, #tpu.memory_space<vmem>>, vector<128x512xbf16>
    %c0_20 = arith.constant 0 : index
    %c0_21 = arith.constant 0 : index
    %43 = vector.load %arg4[%c0_20, %c0_21] : memref<128x512xbf16, #tpu.memory_space<vmem>>, vector<128x512xbf16>
    %44 = arith.index_cast %41 : i32 to index
    %c0_22 = arith.constant 0 : index
    %45 = vector.load %arg0[%44, %c0_22] : memref<64x128xf32, #tpu.memory_space<vmem>>, vector<8x128xf32>
    %46 = arith.truncf %45 : vector<8x128xf32> to vector<8x128xbf16>
    %cst_23 = arith.constant dense<0.000000e+00> : vector<8x512xf32>
    %47 = tpu.matmul %46, %42, %cst_23 {dimension_numbers = #tpu.dot_dimension_numbers<[1], [0], [0], [1], [0, 0, 1, 1], [], []>} : vector<8x128xbf16>, vector<128x512xbf16>, vector<8x512xf32> -> vector<8x512xf32>
    %c0_24 = arith.constant 0 : index
    %c0_25 = arith.constant 0 : index
    %48 = vector.load %arg5[%c0_24, %c0_25] : memref<8x512xf32, #tpu.memory_space<vmem>>, vector<8x512xf32>
    %49 = arith.addf %47, %48 : vector<8x512xf32>
    %50 = arith.truncf %39 : vector<8x128xf32> to vector<8x128xbf16>
    %cst_26 = arith.constant dense<0.000000e+00> : vector<8x512xf32>
    %51 = tpu.matmul %50, %43, %cst_26 {dimension_numbers = #tpu.dot_dimension_numbers<[1], [0], [0], [1], [0, 0, 1, 1], [], []>} : vector<8x128xbf16>, vector<128x512xbf16>, vector<8x512xf32> -> vector<8x512xf32>
    %52 = arith.addf %49, %51 : vector<8x512xf32>
    %53 = vector.extract_strided_slice %52 {offsets = [0, 0], sizes = [8, 128], strides = [1, 1]} : vector<8x512xf32> to vector<8x128xf32>
    %54 = math.tanh %53 : vector<8x128xf32>
    %cst_27 = arith.constant 5.000000e-01 : f32
    %55 = vector.broadcast %cst_27 : f32 to vector<8x128xf32>
    %56 = arith.mulf %55, %54 : vector<8x128xf32>
    %cst_28 = arith.constant 5.000000e-01 : f32
    %57 = vector.broadcast %cst_28 : f32 to vector<8x128xf32>
    %58 = arith.addf %56, %57 : vector<8x128xf32>
    %59 = vector.extract_strided_slice %52 {offsets = [0, 128], sizes = [8, 128], strides = [1, 1]} : vector<8x512xf32> to vector<8x128xf32>
    %60 = math.tanh %59 : vector<8x128xf32>
    %cst_29 = arith.constant 5.000000e-01 : f32
    %61 = vector.broadcast %cst_29 : f32 to vector<8x128xf32>
    %62 = arith.mulf %61, %60 : vector<8x128xf32>
    %cst_30 = arith.constant 5.000000e-01 : f32
    %63 = vector.broadcast %cst_30 : f32 to vector<8x128xf32>
    %64 = arith.addf %62, %63 : vector<8x128xf32>
    %65 = vector.extract_strided_slice %52 {offsets = [0, 256], sizes = [8, 128], strides = [1, 1]} : vector<8x512xf32> to vector<8x128xf32>
    %66 = math.tanh %65 : vector<8x128xf32>
    %67 = vector.extract_strided_slice %52 {offsets = [0, 384], sizes = [8, 128], strides = [1, 1]} : vector<8x512xf32> to vector<8x128xf32>
    %68 = math.tanh %67 : vector<8x128xf32>
    %cst_31 = arith.constant 5.000000e-01 : f32
    %69 = vector.broadcast %cst_31 : f32 to vector<8x128xf32>
    %70 = arith.mulf %69, %68 : vector<8x128xf32>
    %cst_32 = arith.constant 5.000000e-01 : f32
    %71 = vector.broadcast %cst_32 : f32 to vector<8x128xf32>
    %72 = arith.addf %70, %71 : vector<8x128xf32>
    %73 = arith.mulf %64, %37 : vector<8x128xf32>
    %74 = arith.mulf %58, %66 : vector<8x128xf32>
    %75 = arith.addf %73, %74 : vector<8x128xf32>
    %76 = math.tanh %75 : vector<8x128xf32>
    %77 = arith.mulf %72, %76 : vector<8x128xf32>
    %c2_i32 = arith.constant 2 : i32
    %c8_i32_33 = arith.constant 8 : i32
    %78 = arith.muli %c2_i32, %c8_i32_33 : i32
    %79 = tpu.assume_multiple %78, 8 : i32
    %c0_34 = arith.constant 0 : index
    %c0_35 = arith.constant 0 : index
    %80 = vector.load %arg3[%c0_34, %c0_35] : memref<128x512xbf16, #tpu.memory_space<vmem>>, vector<128x512xbf16>
    %c0_36 = arith.constant 0 : index
    %c0_37 = arith.constant 0 : index
    %81 = vector.load %arg4[%c0_36, %c0_37] : memref<128x512xbf16, #tpu.memory_space<vmem>>, vector<128x512xbf16>
    %82 = arith.index_cast %79 : i32 to index
    %c0_38 = arith.constant 0 : index
    %83 = vector.load %arg0[%82, %c0_38] : memref<64x128xf32, #tpu.memory_space<vmem>>, vector<8x128xf32>
    %84 = arith.truncf %83 : vector<8x128xf32> to vector<8x128xbf16>
    %cst_39 = arith.constant dense<0.000000e+00> : vector<8x512xf32>
    %85 = tpu.matmul %84, %80, %cst_39 {dimension_numbers = #tpu.dot_dimension_numbers<[1], [0], [0], [1], [0, 0, 1, 1], [], []>} : vector<8x128xbf16>, vector<128x512xbf16>, vector<8x512xf32> -> vector<8x512xf32>
    %c0_40 = arith.constant 0 : index
    %c0_41 = arith.constant 0 : index
    %86 = vector.load %arg5[%c0_40, %c0_41] : memref<8x512xf32, #tpu.memory_space<vmem>>, vector<8x512xf32>
    %87 = arith.addf %85, %86 : vector<8x512xf32>
    %88 = arith.truncf %77 : vector<8x128xf32> to vector<8x128xbf16>
    %cst_42 = arith.constant dense<0.000000e+00> : vector<8x512xf32>
    %89 = tpu.matmul %88, %81, %cst_42 {dimension_numbers = #tpu.dot_dimension_numbers<[1], [0], [0], [1], [0, 0, 1, 1], [], []>} : vector<8x128xbf16>, vector<128x512xbf16>, vector<8x512xf32> -> vector<8x512xf32>
    %90 = arith.addf %87, %89 : vector<8x512xf32>
    %91 = vector.extract_strided_slice %90 {offsets = [0, 0], sizes = [8, 128], strides = [1, 1]} : vector<8x512xf32> to vector<8x128xf32>
    %92 = math.tanh %91 : vector<8x128xf32>
    %cst_43 = arith.constant 5.000000e-01 : f32
    %93 = vector.broadcast %cst_43 : f32 to vector<8x128xf32>
    %94 = arith.mulf %93, %92 : vector<8x128xf32>
    %cst_44 = arith.constant 5.000000e-01 : f32
    %95 = vector.broadcast %cst_44 : f32 to vector<8x128xf32>
    %96 = arith.addf %94, %95 : vector<8x128xf32>
    %97 = vector.extract_strided_slice %90 {offsets = [0, 128], sizes = [8, 128], strides = [1, 1]} : vector<8x512xf32> to vector<8x128xf32>
    %98 = math.tanh %97 : vector<8x128xf32>
    %cst_45 = arith.constant 5.000000e-01 : f32
    %99 = vector.broadcast %cst_45 : f32 to vector<8x128xf32>
    %100 = arith.mulf %99, %98 : vector<8x128xf32>
    %cst_46 = arith.constant 5.000000e-01 : f32
    %101 = vector.broadcast %cst_46 : f32 to vector<8x128xf32>
    %102 = arith.addf %100, %101 : vector<8x128xf32>
    %103 = vector.extract_strided_slice %90 {offsets = [0, 256], sizes = [8, 128], strides = [1, 1]} : vector<8x512xf32> to vector<8x128xf32>
    %104 = math.tanh %103 : vector<8x128xf32>
    %105 = vector.extract_strided_slice %90 {offsets = [0, 384], sizes = [8, 128], strides = [1, 1]} : vector<8x512xf32> to vector<8x128xf32>
    %106 = math.tanh %105 : vector<8x128xf32>
    %cst_47 = arith.constant 5.000000e-01 : f32
    %107 = vector.broadcast %cst_47 : f32 to vector<8x128xf32>
    %108 = arith.mulf %107, %106 : vector<8x128xf32>
    %cst_48 = arith.constant 5.000000e-01 : f32
    %109 = vector.broadcast %cst_48 : f32 to vector<8x128xf32>
    %110 = arith.addf %108, %109 : vector<8x128xf32>
    %111 = arith.mulf %102, %75 : vector<8x128xf32>
    %112 = arith.mulf %96, %104 : vector<8x128xf32>
    %113 = arith.addf %111, %112 : vector<8x128xf32>
    %114 = math.tanh %113 : vector<8x128xf32>
    %115 = arith.mulf %110, %114 : vector<8x128xf32>
    %c3_i32 = arith.constant 3 : i32
    %c8_i32_49 = arith.constant 8 : i32
    %116 = arith.muli %c3_i32, %c8_i32_49 : i32
    %117 = tpu.assume_multiple %116, 8 : i32
    %c0_50 = arith.constant 0 : index
    %c0_51 = arith.constant 0 : index
    %118 = vector.load %arg3[%c0_50, %c0_51] : memref<128x512xbf16, #tpu.memory_space<vmem>>, vector<128x512xbf16>
    %c0_52 = arith.constant 0 : index
    %c0_53 = arith.constant 0 : index
    %119 = vector.load %arg4[%c0_52, %c0_53] : memref<128x512xbf16, #tpu.memory_space<vmem>>, vector<128x512xbf16>
    %120 = arith.index_cast %117 : i32 to index
    %c0_54 = arith.constant 0 : index
    %121 = vector.load %arg0[%120, %c0_54] : memref<64x128xf32, #tpu.memory_space<vmem>>, vector<8x128xf32>
    %122 = arith.truncf %121 : vector<8x128xf32> to vector<8x128xbf16>
    %cst_55 = arith.constant dense<0.000000e+00> : vector<8x512xf32>
    %123 = tpu.matmul %122, %118, %cst_55 {dimension_numbers = #tpu.dot_dimension_numbers<[1], [0], [0], [1], [0, 0, 1, 1], [], []>} : vector<8x128xbf16>, vector<128x512xbf16>, vector<8x512xf32> -> vector<8x512xf32>
    %c0_56 = arith.constant 0 : index
    %c0_57 = arith.constant 0 : index
    %124 = vector.load %arg5[%c0_56, %c0_57] : memref<8x512xf32, #tpu.memory_space<vmem>>, vector<8x512xf32>
    %125 = arith.addf %123, %124 : vector<8x512xf32>
    %126 = arith.truncf %115 : vector<8x128xf32> to vector<8x128xbf16>
    %cst_58 = arith.constant dense<0.000000e+00> : vector<8x512xf32>
    %127 = tpu.matmul %126, %119, %cst_58 {dimension_numbers = #tpu.dot_dimension_numbers<[1], [0], [0], [1], [0, 0, 1, 1], [], []>} : vector<8x128xbf16>, vector<128x512xbf16>, vector<8x512xf32> -> vector<8x512xf32>
    %128 = arith.addf %125, %127 : vector<8x512xf32>
    %129 = vector.extract_strided_slice %128 {offsets = [0, 0], sizes = [8, 128], strides = [1, 1]} : vector<8x512xf32> to vector<8x128xf32>
    %130 = math.tanh %129 : vector<8x128xf32>
    %cst_59 = arith.constant 5.000000e-01 : f32
    %131 = vector.broadcast %cst_59 : f32 to vector<8x128xf32>
    %132 = arith.mulf %131, %130 : vector<8x128xf32>
    %cst_60 = arith.constant 5.000000e-01 : f32
    %133 = vector.broadcast %cst_60 : f32 to vector<8x128xf32>
    %134 = arith.addf %132, %133 : vector<8x128xf32>
    %135 = vector.extract_strided_slice %128 {offsets = [0, 128], sizes = [8, 128], strides = [1, 1]} : vector<8x512xf32> to vector<8x128xf32>
    %136 = math.tanh %135 : vector<8x128xf32>
    %cst_61 = arith.constant 5.000000e-01 : f32
    %137 = vector.broadcast %cst_61 : f32 to vector<8x128xf32>
    %138 = arith.mulf %137, %136 : vector<8x128xf32>
    %cst_62 = arith.constant 5.000000e-01 : f32
    %139 = vector.broadcast %cst_62 : f32 to vector<8x128xf32>
    %140 = arith.addf %138, %139 : vector<8x128xf32>
    %141 = vector.extract_strided_slice %128 {offsets = [0, 256], sizes = [8, 128], strides = [1, 1]} : vector<8x512xf32> to vector<8x128xf32>
    %142 = math.tanh %141 : vector<8x128xf32>
    %143 = vector.extract_strided_slice %128 {offsets = [0, 384], sizes = [8, 128], strides = [1, 1]} : vector<8x512xf32> to vector<8x128xf32>
    %144 = math.tanh %143 : vector<8x128xf32>
    %cst_63 = arith.constant 5.000000e-01 : f32
    %145 = vector.broadcast %cst_63 : f32 to vector<8x128xf32>
    %146 = arith.mulf %145, %144 : vector<8x128xf32>
    %cst_64 = arith.constant 5.000000e-01 : f32
    %147 = vector.broadcast %cst_64 : f32 to vector<8x128xf32>
    %148 = arith.addf %146, %147 : vector<8x128xf32>
    %149 = arith.mulf %140, %113 : vector<8x128xf32>
    %150 = arith.mulf %134, %142 : vector<8x128xf32>
    %151 = arith.addf %149, %150 : vector<8x128xf32>
    %152 = math.tanh %151 : vector<8x128xf32>
    %153 = arith.mulf %148, %152 : vector<8x128xf32>
    %c4_i32 = arith.constant 4 : i32
    %c8_i32_65 = arith.constant 8 : i32
    %154 = arith.muli %c4_i32, %c8_i32_65 : i32
    %155 = tpu.assume_multiple %154, 8 : i32
    %c0_66 = arith.constant 0 : index
    %c0_67 = arith.constant 0 : index
    %156 = vector.load %arg3[%c0_66, %c0_67] : memref<128x512xbf16, #tpu.memory_space<vmem>>, vector<128x512xbf16>
    %c0_68 = arith.constant 0 : index
    %c0_69 = arith.constant 0 : index
    %157 = vector.load %arg4[%c0_68, %c0_69] : memref<128x512xbf16, #tpu.memory_space<vmem>>, vector<128x512xbf16>
    %158 = arith.index_cast %155 : i32 to index
    %c0_70 = arith.constant 0 : index
    %159 = vector.load %arg0[%158, %c0_70] : memref<64x128xf32, #tpu.memory_space<vmem>>, vector<8x128xf32>
    %160 = arith.truncf %159 : vector<8x128xf32> to vector<8x128xbf16>
    %cst_71 = arith.constant dense<0.000000e+00> : vector<8x512xf32>
    %161 = tpu.matmul %160, %156, %cst_71 {dimension_numbers = #tpu.dot_dimension_numbers<[1], [0], [0], [1], [0, 0, 1, 1], [], []>} : vector<8x128xbf16>, vector<128x512xbf16>, vector<8x512xf32> -> vector<8x512xf32>
    %c0_72 = arith.constant 0 : index
    %c0_73 = arith.constant 0 : index
    %162 = vector.load %arg5[%c0_72, %c0_73] : memref<8x512xf32, #tpu.memory_space<vmem>>, vector<8x512xf32>
    %163 = arith.addf %161, %162 : vector<8x512xf32>
    %164 = arith.truncf %153 : vector<8x128xf32> to vector<8x128xbf16>
    %cst_74 = arith.constant dense<0.000000e+00> : vector<8x512xf32>
    %165 = tpu.matmul %164, %157, %cst_74 {dimension_numbers = #tpu.dot_dimension_numbers<[1], [0], [0], [1], [0, 0, 1, 1], [], []>} : vector<8x128xbf16>, vector<128x512xbf16>, vector<8x512xf32> -> vector<8x512xf32>
    %166 = arith.addf %163, %165 : vector<8x512xf32>
    %167 = vector.extract_strided_slice %166 {offsets = [0, 0], sizes = [8, 128], strides = [1, 1]} : vector<8x512xf32> to vector<8x128xf32>
    %168 = math.tanh %167 : vector<8x128xf32>
    %cst_75 = arith.constant 5.000000e-01 : f32
    %169 = vector.broadcast %cst_75 : f32 to vector<8x128xf32>
    %170 = arith.mulf %169, %168 : vector<8x128xf32>
    %cst_76 = arith.constant 5.000000e-01 : f32
    %171 = vector.broadcast %cst_76 : f32 to vector<8x128xf32>
    %172 = arith.addf %170, %171 : vector<8x128xf32>
    %173 = vector.extract_strided_slice %166 {offsets = [0, 128], sizes = [8, 128], strides = [1, 1]} : vector<8x512xf32> to vector<8x128xf32>
    %174 = math.tanh %173 : vector<8x128xf32>
    %cst_77 = arith.constant 5.000000e-01 : f32
    %175 = vector.broadcast %cst_77 : f32 to vector<8x128xf32>
    %176 = arith.mulf %175, %174 : vector<8x128xf32>
    %cst_78 = arith.constant 5.000000e-01 : f32
    %177 = vector.broadcast %cst_78 : f32 to vector<8x128xf32>
    %178 = arith.addf %176, %177 : vector<8x128xf32>
    %179 = vector.extract_strided_slice %166 {offsets = [0, 256], sizes = [8, 128], strides = [1, 1]} : vector<8x512xf32> to vector<8x128xf32>
    %180 = math.tanh %179 : vector<8x128xf32>
    %181 = vector.extract_strided_slice %166 {offsets = [0, 384], sizes = [8, 128], strides = [1, 1]} : vector<8x512xf32> to vector<8x128xf32>
    %182 = math.tanh %181 : vector<8x128xf32>
    %cst_79 = arith.constant 5.000000e-01 : f32
    %183 = vector.broadcast %cst_79 : f32 to vector<8x128xf32>
    %184 = arith.mulf %183, %182 : vector<8x128xf32>
    %cst_80 = arith.constant 5.000000e-01 : f32
    %185 = vector.broadcast %cst_80 : f32 to vector<8x128xf32>
    %186 = arith.addf %184, %185 : vector<8x128xf32>
    %187 = arith.mulf %178, %151 : vector<8x128xf32>
    %188 = arith.mulf %172, %180 : vector<8x128xf32>
    %189 = arith.addf %187, %188 : vector<8x128xf32>
    %190 = math.tanh %189 : vector<8x128xf32>
    %191 = arith.mulf %186, %190 : vector<8x128xf32>
    %c5_i32 = arith.constant 5 : i32
    %c8_i32_81 = arith.constant 8 : i32
    %192 = arith.muli %c5_i32, %c8_i32_81 : i32
    %193 = tpu.assume_multiple %192, 8 : i32
    %c0_82 = arith.constant 0 : index
    %c0_83 = arith.constant 0 : index
    %194 = vector.load %arg3[%c0_82, %c0_83] : memref<128x512xbf16, #tpu.memory_space<vmem>>, vector<128x512xbf16>
    %c0_84 = arith.constant 0 : index
    %c0_85 = arith.constant 0 : index
    %195 = vector.load %arg4[%c0_84, %c0_85] : memref<128x512xbf16, #tpu.memory_space<vmem>>, vector<128x512xbf16>
    %196 = arith.index_cast %193 : i32 to index
    %c0_86 = arith.constant 0 : index
    %197 = vector.load %arg0[%196, %c0_86] : memref<64x128xf32, #tpu.memory_space<vmem>>, vector<8x128xf32>
    %198 = arith.truncf %197 : vector<8x128xf32> to vector<8x128xbf16>
    %cst_87 = arith.constant dense<0.000000e+00> : vector<8x512xf32>
    %199 = tpu.matmul %198, %194, %cst_87 {dimension_numbers = #tpu.dot_dimension_numbers<[1], [0], [0], [1], [0, 0, 1, 1], [], []>} : vector<8x128xbf16>, vector<128x512xbf16>, vector<8x512xf32> -> vector<8x512xf32>
    %c0_88 = arith.constant 0 : index
    %c0_89 = arith.constant 0 : index
    %200 = vector.load %arg5[%c0_88, %c0_89] : memref<8x512xf32, #tpu.memory_space<vmem>>, vector<8x512xf32>
    %201 = arith.addf %199, %200 : vector<8x512xf32>
    %202 = arith.truncf %191 : vector<8x128xf32> to vector<8x128xbf16>
    %cst_90 = arith.constant dense<0.000000e+00> : vector<8x512xf32>
    %203 = tpu.matmul %202, %195, %cst_90 {dimension_numbers = #tpu.dot_dimension_numbers<[1], [0], [0], [1], [0, 0, 1, 1], [], []>} : vector<8x128xbf16>, vector<128x512xbf16>, vector<8x512xf32> -> vector<8x512xf32>
    %204 = arith.addf %201, %203 : vector<8x512xf32>
    %205 = vector.extract_strided_slice %204 {offsets = [0, 0], sizes = [8, 128], strides = [1, 1]} : vector<8x512xf32> to vector<8x128xf32>
    %206 = math.tanh %205 : vector<8x128xf32>
    %cst_91 = arith.constant 5.000000e-01 : f32
    %207 = vector.broadcast %cst_91 : f32 to vector<8x128xf32>
    %208 = arith.mulf %207, %206 : vector<8x128xf32>
    %cst_92 = arith.constant 5.000000e-01 : f32
    %209 = vector.broadcast %cst_92 : f32 to vector<8x128xf32>
    %210 = arith.addf %208, %209 : vector<8x128xf32>
    %211 = vector.extract_strided_slice %204 {offsets = [0, 128], sizes = [8, 128], strides = [1, 1]} : vector<8x512xf32> to vector<8x128xf32>
    %212 = math.tanh %211 : vector<8x128xf32>
    %cst_93 = arith.constant 5.000000e-01 : f32
    %213 = vector.broadcast %cst_93 : f32 to vector<8x128xf32>
    %214 = arith.mulf %213, %212 : vector<8x128xf32>
    %cst_94 = arith.constant 5.000000e-01 : f32
    %215 = vector.broadcast %cst_94 : f32 to vector<8x128xf32>
    %216 = arith.addf %214, %215 : vector<8x128xf32>
    %217 = vector.extract_strided_slice %204 {offsets = [0, 256], sizes = [8, 128], strides = [1, 1]} : vector<8x512xf32> to vector<8x128xf32>
    %218 = math.tanh %217 : vector<8x128xf32>
    %219 = vector.extract_strided_slice %204 {offsets = [0, 384], sizes = [8, 128], strides = [1, 1]} : vector<8x512xf32> to vector<8x128xf32>
    %220 = math.tanh %219 : vector<8x128xf32>
    %cst_95 = arith.constant 5.000000e-01 : f32
    %221 = vector.broadcast %cst_95 : f32 to vector<8x128xf32>
    %222 = arith.mulf %221, %220 : vector<8x128xf32>
    %cst_96 = arith.constant 5.000000e-01 : f32
    %223 = vector.broadcast %cst_96 : f32 to vector<8x128xf32>
    %224 = arith.addf %222, %223 : vector<8x128xf32>
    %225 = arith.mulf %216, %189 : vector<8x128xf32>
    %226 = arith.mulf %210, %218 : vector<8x128xf32>
    %227 = arith.addf %225, %226 : vector<8x128xf32>
    %228 = math.tanh %227 : vector<8x128xf32>
    %229 = arith.mulf %224, %228 : vector<8x128xf32>
    %c6_i32 = arith.constant 6 : i32
    %c8_i32_97 = arith.constant 8 : i32
    %230 = arith.muli %c6_i32, %c8_i32_97 : i32
    %231 = tpu.assume_multiple %230, 8 : i32
    %c0_98 = arith.constant 0 : index
    %c0_99 = arith.constant 0 : index
    %232 = vector.load %arg3[%c0_98, %c0_99] : memref<128x512xbf16, #tpu.memory_space<vmem>>, vector<128x512xbf16>
    %c0_100 = arith.constant 0 : index
    %c0_101 = arith.constant 0 : index
    %233 = vector.load %arg4[%c0_100, %c0_101] : memref<128x512xbf16, #tpu.memory_space<vmem>>, vector<128x512xbf16>
    %234 = arith.index_cast %231 : i32 to index
    %c0_102 = arith.constant 0 : index
    %235 = vector.load %arg0[%234, %c0_102] : memref<64x128xf32, #tpu.memory_space<vmem>>, vector<8x128xf32>
    %236 = arith.truncf %235 : vector<8x128xf32> to vector<8x128xbf16>
    %cst_103 = arith.constant dense<0.000000e+00> : vector<8x512xf32>
    %237 = tpu.matmul %236, %232, %cst_103 {dimension_numbers = #tpu.dot_dimension_numbers<[1], [0], [0], [1], [0, 0, 1, 1], [], []>} : vector<8x128xbf16>, vector<128x512xbf16>, vector<8x512xf32> -> vector<8x512xf32>
    %c0_104 = arith.constant 0 : index
    %c0_105 = arith.constant 0 : index
    %238 = vector.load %arg5[%c0_104, %c0_105] : memref<8x512xf32, #tpu.memory_space<vmem>>, vector<8x512xf32>
    %239 = arith.addf %237, %238 : vector<8x512xf32>
    %240 = arith.truncf %229 : vector<8x128xf32> to vector<8x128xbf16>
    %cst_106 = arith.constant dense<0.000000e+00> : vector<8x512xf32>
    %241 = tpu.matmul %240, %233, %cst_106 {dimension_numbers = #tpu.dot_dimension_numbers<[1], [0], [0], [1], [0, 0, 1, 1], [], []>} : vector<8x128xbf16>, vector<128x512xbf16>, vector<8x512xf32> -> vector<8x512xf32>
    %242 = arith.addf %239, %241 : vector<8x512xf32>
    %243 = vector.extract_strided_slice %242 {offsets = [0, 0], sizes = [8, 128], strides = [1, 1]} : vector<8x512xf32> to vector<8x128xf32>
    %244 = math.tanh %243 : vector<8x128xf32>
    %cst_107 = arith.constant 5.000000e-01 : f32
    %245 = vector.broadcast %cst_107 : f32 to vector<8x128xf32>
    %246 = arith.mulf %245, %244 : vector<8x128xf32>
    %cst_108 = arith.constant 5.000000e-01 : f32
    %247 = vector.broadcast %cst_108 : f32 to vector<8x128xf32>
    %248 = arith.addf %246, %247 : vector<8x128xf32>
    %249 = vector.extract_strided_slice %242 {offsets = [0, 128], sizes = [8, 128], strides = [1, 1]} : vector<8x512xf32> to vector<8x128xf32>
    %250 = math.tanh %249 : vector<8x128xf32>
    %cst_109 = arith.constant 5.000000e-01 : f32
    %251 = vector.broadcast %cst_109 : f32 to vector<8x128xf32>
    %252 = arith.mulf %251, %250 : vector<8x128xf32>
    %cst_110 = arith.constant 5.000000e-01 : f32
    %253 = vector.broadcast %cst_110 : f32 to vector<8x128xf32>
    %254 = arith.addf %252, %253 : vector<8x128xf32>
    %255 = vector.extract_strided_slice %242 {offsets = [0, 256], sizes = [8, 128], strides = [1, 1]} : vector<8x512xf32> to vector<8x128xf32>
    %256 = math.tanh %255 : vector<8x128xf32>
    %257 = vector.extract_strided_slice %242 {offsets = [0, 384], sizes = [8, 128], strides = [1, 1]} : vector<8x512xf32> to vector<8x128xf32>
    %258 = math.tanh %257 : vector<8x128xf32>
    %cst_111 = arith.constant 5.000000e-01 : f32
    %259 = vector.broadcast %cst_111 : f32 to vector<8x128xf32>
    %260 = arith.mulf %259, %258 : vector<8x128xf32>
    %cst_112 = arith.constant 5.000000e-01 : f32
    %261 = vector.broadcast %cst_112 : f32 to vector<8x128xf32>
    %262 = arith.addf %260, %261 : vector<8x128xf32>
    %263 = arith.mulf %254, %227 : vector<8x128xf32>
    %264 = arith.mulf %248, %256 : vector<8x128xf32>
    %265 = arith.addf %263, %264 : vector<8x128xf32>
    %266 = math.tanh %265 : vector<8x128xf32>
    %267 = arith.mulf %262, %266 : vector<8x128xf32>
    %c7_i32 = arith.constant 7 : i32
    %c8_i32_113 = arith.constant 8 : i32
    %268 = arith.muli %c7_i32, %c8_i32_113 : i32
    %269 = tpu.assume_multiple %268, 8 : i32
    %c0_114 = arith.constant 0 : index
    %c0_115 = arith.constant 0 : index
    %270 = vector.load %arg3[%c0_114, %c0_115] : memref<128x512xbf16, #tpu.memory_space<vmem>>, vector<128x512xbf16>
    %c0_116 = arith.constant 0 : index
    %c0_117 = arith.constant 0 : index
    %271 = vector.load %arg4[%c0_116, %c0_117] : memref<128x512xbf16, #tpu.memory_space<vmem>>, vector<128x512xbf16>
    %272 = arith.index_cast %269 : i32 to index
    %c0_118 = arith.constant 0 : index
    %273 = vector.load %arg0[%272, %c0_118] : memref<64x128xf32, #tpu.memory_space<vmem>>, vector<8x128xf32>
    %274 = arith.truncf %273 : vector<8x128xf32> to vector<8x128xbf16>
    %cst_119 = arith.constant dense<0.000000e+00> : vector<8x512xf32>
    %275 = tpu.matmul %274, %270, %cst_119 {dimension_numbers = #tpu.dot_dimension_numbers<[1], [0], [0], [1], [0, 0, 1, 1], [], []>} : vector<8x128xbf16>, vector<128x512xbf16>, vector<8x512xf32> -> vector<8x512xf32>
    %c0_120 = arith.constant 0 : index
    %c0_121 = arith.constant 0 : index
    %276 = vector.load %arg5[%c0_120, %c0_121] : memref<8x512xf32, #tpu.memory_space<vmem>>, vector<8x512xf32>
    %277 = arith.addf %275, %276 : vector<8x512xf32>
    %278 = arith.truncf %267 : vector<8x128xf32> to vector<8x128xbf16>
    %cst_122 = arith.constant dense<0.000000e+00> : vector<8x512xf32>
    %279 = tpu.matmul %278, %271, %cst_122 {dimension_numbers = #tpu.dot_dimension_numbers<[1], [0], [0], [1], [0, 0, 1, 1], [], []>} : vector<8x128xbf16>, vector<128x512xbf16>, vector<8x512xf32> -> vector<8x512xf32>
    %280 = arith.addf %277, %279 : vector<8x512xf32>
    %281 = vector.extract_strided_slice %280 {offsets = [0, 0], sizes = [8, 128], strides = [1, 1]} : vector<8x512xf32> to vector<8x128xf32>
    %282 = math.tanh %281 : vector<8x128xf32>
    %cst_123 = arith.constant 5.000000e-01 : f32
    %283 = vector.broadcast %cst_123 : f32 to vector<8x128xf32>
    %284 = arith.mulf %283, %282 : vector<8x128xf32>
    %cst_124 = arith.constant 5.000000e-01 : f32
    %285 = vector.broadcast %cst_124 : f32 to vector<8x128xf32>
    %286 = arith.addf %284, %285 : vector<8x128xf32>
    %287 = vector.extract_strided_slice %280 {offsets = [0, 128], sizes = [8, 128], strides = [1, 1]} : vector<8x512xf32> to vector<8x128xf32>
    %288 = math.tanh %287 : vector<8x128xf32>
    %cst_125 = arith.constant 5.000000e-01 : f32
    %289 = vector.broadcast %cst_125 : f32 to vector<8x128xf32>
    %290 = arith.mulf %289, %288 : vector<8x128xf32>
    %cst_126 = arith.constant 5.000000e-01 : f32
    %291 = vector.broadcast %cst_126 : f32 to vector<8x128xf32>
    %292 = arith.addf %290, %291 : vector<8x128xf32>
    %293 = vector.extract_strided_slice %280 {offsets = [0, 256], sizes = [8, 128], strides = [1, 1]} : vector<8x512xf32> to vector<8x128xf32>
    %294 = math.tanh %293 : vector<8x128xf32>
    %295 = vector.extract_strided_slice %280 {offsets = [0, 384], sizes = [8, 128], strides = [1, 1]} : vector<8x512xf32> to vector<8x128xf32>
    %296 = math.tanh %295 : vector<8x128xf32>
    %cst_127 = arith.constant 5.000000e-01 : f32
    %297 = vector.broadcast %cst_127 : f32 to vector<8x128xf32>
    %298 = arith.mulf %297, %296 : vector<8x128xf32>
    %cst_128 = arith.constant 5.000000e-01 : f32
    %299 = vector.broadcast %cst_128 : f32 to vector<8x128xf32>
    %300 = arith.addf %298, %299 : vector<8x128xf32>
    %301 = arith.mulf %292, %265 : vector<8x128xf32>
    %302 = arith.mulf %286, %294 : vector<8x128xf32>
    %303 = arith.addf %301, %302 : vector<8x128xf32>
    %304 = math.tanh %303 : vector<8x128xf32>
    %305 = arith.mulf %300, %304 : vector<8x128xf32>
    %c8_i32_129 = arith.constant 8 : i32
    %306 = arith.truncf %305 : vector<8x128xf32> to vector<8x128xbf16>
    %c0_130 = arith.constant 0 : index
    %c0_131 = arith.constant 0 : index
    %307 = vector.load %arg6[%c0_130, %c0_131] : memref<128x128xbf16, #tpu.memory_space<vmem>>, vector<128x128xbf16>
    %cst_132 = arith.constant dense<0.000000e+00> : vector<8x128xf32>
    %308 = tpu.matmul %306, %307, %cst_132 {dimension_numbers = #tpu.dot_dimension_numbers<[1], [0], [0], [1], [0, 0, 1, 1], [], []>} : vector<8x128xbf16>, vector<128x128xbf16>, vector<8x128xf32> -> vector<8x128xf32>
    %c0_133 = arith.constant 0 : index
    %c0_134 = arith.constant 0 : index
    %309 = vector.load %arg7[%c0_133, %c0_134] : memref<1x128xf32, #tpu.memory_space<vmem>>, vector<1x128xf32>
    %310 = vector.broadcast %309 : vector<1x128xf32> to vector<8x128xf32>
    %311 = arith.addf %308, %310 : vector<8x128xf32>
    %c0_135 = arith.constant 0 : index
    %c0_136 = arith.constant 0 : index
    %312 = vector.load %arg8[%c0_135, %c0_136] : memref<8x128xf32, #tpu.memory_space<vmem>>, vector<8x128xf32>
    tpu.vector_store %arg8[%c0_135, %c0_136], %311 {strides = array<i32>} : memref<8x128xf32, #tpu.memory_space<vmem>>, vector<8x128xf32>,
    %c0_137 = arith.constant 0 : index
    %c0_138 = arith.constant 0 : index
    %313 = vector.load %arg9[%c0_137, %c0_138] : memref<8x128xf32, #tpu.memory_space<vmem>>, vector<8x128xf32>
    tpu.vector_store %arg9[%c0_137, %c0_138], %305 {strides = array<i32>} : memref<8x128xf32, #tpu.memory_space<vmem>>, vector<8x128xf32>,
    %c0_139 = arith.constant 0 : index
    %c0_140 = arith.constant 0 : index
    %314 = vector.load %arg10[%c0_139, %c0_140] : memref<8x128xf32, #tpu.memory_space<vmem>>, vector<8x128xf32>
    tpu.vector_store %arg10[%c0_139, %c0_140], %303 {strides = array<i32>} : memref<8x128xf32, #tpu.memory_space<vmem>>, vector<8x128xf32>,
    return
  }
}

</mosaic_0001>

<llo_original>
// kernel: _lambda_.1
$region0: #{_lambda_.1}
  #allocation0 [shape = 'u32[]', space=smem, size = 0x4, offset = 0x4, fixed_abs, tag = 'smem constant byte address 0x4 - core index']
  #allocation1 [shape = 'u32[144,128]{1,0:T(1,128)}', space=vmem, size = 0x12000, scoped, tag = 'internal scratch']
  %s0 = inlined_call_operand.vmem [shape: f32[64,128], index: 0, kind: input, shape index: {}]
  %s1 = inlined_call_operand.vmem [shape: f32[8,128], index: 1, kind: input, shape index: {}, may-alias: {1,2}]
  %s2 = inlined_call_operand.vmem [shape: f32[8,128], index: 2, kind: input, shape index: {}, may-alias: {1,2}]
  %s3 = inlined_call_operand.vmem [shape: bf16[128,512], index: 3, kind: input, shape index: {}]
  %s4 = inlined_call_operand.hbm [shape: bf16[128,512], index: 4, kind: input, shape index: {}]
  %s5 = inlined_call_operand.vmem [shape: f32[8,512], index: 5, kind: input, shape index: {}]
  %s6 = inlined_call_operand.vmem [shape: bf16[128,128], index: 6, kind: input, shape index: {}]
  %s7 = inlined_call_operand.vmem [shape: f32[1,128], index: 7, kind: input, shape index: {}]
  %s8 = inlined_call_operand.vmem [shape: f32[8,128], index: 8, kind: output, shape index: {0}]
  %s9 = inlined_call_operand.vmem [shape: f32[8,128], index: 9, kind: output, shape index: {1}]
  %s10 = inlined_call_operand.vmem [shape: f32[8,128], index: 10, kind: output, shape index: {2}]
  %11 = xla_tuple %s8, %s9, %s10
  %s12 = sld [smem:[#allocation0]]
  $region62: #{_lambda_.1} parent=0
    _
  %s14 = ssub.s32 1, %s12
  %s15 = scalar_select 0, %s14, %s12
  $region1: #{_lambda_.1} parent=0
    #allocation2 [shape = 'u8[131072]{0}', space=vmem, size = 0x20000, scoped, tag = 'input window, operand 4, single buffered']
    #allocation3 [shape = 's32[1]{0}', space=sflag, size = 0x4, scoped, tag = 'scoped memory for _lambda_.1']
    %16 = vsyncpa [#allocation3], 0
    // Predicated region
    $region2: #{_lambda_.1} parent=1 // pred_check
      _
    $region3: #{_lambda_.1} parent=1 // pred_check_branch
      %18 = sbr.rel (0) target = $region5
    $region4: #{_lambda_.1} parent=1 // pred_region
      _
    $region5: #{_lambda_.1} parent=1 // pred_fallthru
      _
    // Predicated region
    $region6: #{_lambda_.1} parent=1 // pred_check
      _
    $region7: #{_lambda_.1} parent=1 // pred_check_branch
      %20 = sbr.rel (0) target = $region9
    $region8: #{_lambda_.1} parent=1 // pred_region
      _
    $region9: #{_lambda_.1} parent=1 // pred_fallthru
      _
    // Predicated region
    $region10: #{_lambda_.1} parent=1 // pred_check
      _
    $region11: #{_lambda_.1} parent=1 // pred_check_branch
      %22 = sbr.rel (0) target = $region13
    $region12: #{_lambda_.1} parent=1 // pred_region
      _
    $region13: #{_lambda_.1} parent=1 // pred_fallthru
      _
    // Predicated region
    $region14: #{_lambda_.1} parent=1 // pred_check
      _
    $region15: #{_lambda_.1} parent=1 // pred_check_branch
      %24 = sbr.rel (0) target = $region17
    $region16: #{_lambda_.1} parent=1 // pred_region
      _
    $region17: #{_lambda_.1} parent=1 // pred_fallthru
      _
    // Predicated region
    $region18: #{_lambda_.1} parent=1 // pred_check
      _
    $region19: #{_lambda_.1} parent=1 // pred_check_branch
      %26 = sbr.rel (0) target = $region21
    $region20: #{_lambda_.1} parent=1 // pred_region
      %s28 = ssub.s32 4096, 4096
      %29 = vsyncadd [#allocation3], %s28
      %s30 = sshll.u32 [#allocation2], 4
      %s31 = int_to_ptr.vmem [resolvable:$true] %s30
      %36 = dma.hbm_to_vmem [thread:$0]  %s4, 4096, %s31, [#allocation3], 256, 256, 16
    $region21: #{_lambda_.1} parent=1 // pred_fallthru
      _
    // Predicated region
    $region22: #{_lambda_.1} parent=1 // pred_check
      _
    $region23: #{_lambda_.1} parent=1 // pred_check_branch
      %38 = sbr.rel (0) target = $region25
    $region24: #{_lambda_.1} parent=1 // pred_region
      _
    $region25: #{_lambda_.1} parent=1 // pred_fallthru
      _
    // Predicated region
    $region26: #{_lambda_.1} parent=1 // pred_check
      _
    $region27: #{_lambda_.1} parent=1 // pred_check_branch
      %40 = sbr.rel (0) target = $region29
    $region28: #{_lambda_.1} parent=1 // pred_region
      _
    $region29: #{_lambda_.1} parent=1 // pred_fallthru
      _
    // Predicated region
    $region30: #{_lambda_.1} parent=1 // pred_check
      _
    $region31: #{_lambda_.1} parent=1 // pred_check_branch
      %42 = sbr.rel (0) target = $region33
    $region32: #{_lambda_.1} parent=1 // pred_region
      _
    $region33: #{_lambda_.1} parent=1 // pred_fallthru
      _
    // Predicated region
    $region34: #{_lambda_.1} parent=1 // pred_check
      _
    $region35: #{_lambda_.1} parent=1 // pred_check_branch
      %44 = sbr.rel (0) target = $region37
    $region36: #{_lambda_.1} parent=1 // pred_region
      %45 = dma.done [#allocation3], 4096
    $region37: #{_lambda_.1} parent=1 // pred_fallthru
      _
    %v47 = vld [vmem:[%s1] sm:$0xff]
    %v48 = vld [vmem:[%s2] sm:$0xff]
    %v49 = vld [vmem:[%s3] sm:$0xff]
    %v50 = vld [vmem:[%s3 + $0x8] sm:$0xff]
    %v51 = vld [vmem:[%s3 + $0x10] sm:$0xff]
    %v52 = vld [vmem:[%s3 + $0x18] sm:$0xff]
    %v53 = vld [vmem:[%s3 + $0x20] sm:$0xff]
    %v54 = vld [vmem:[%s3 + $0x28] sm:$0xff]
    %v55 = vld [vmem:[%s3 + $0x30] sm:$0xff]
    %v56 = vld [vmem:[%s3 + $0x38] sm:$0xff]
    %v57 = vld [vmem:[%s3 + $0x40] sm:$0xff]
    %v58 = vld [vmem:[%s3 + $0x48] sm:$0xff]
    %v59 = vld [vmem:[%s3 + $0x50] sm:$0xff]
    %v60 = vld [vmem:[%s3 + $0x58] sm:$0xff]
    %v61 = vld [vmem:[%s3 + $0x60] sm:$0xff]
    %v62 = vld [vmem:[%s3 + $0x68] sm:$0xff]
    %v63 = vld [vmem:[%s3 + $0x70] sm:$0xff]
    %v64 = vld [vmem:[%s3 + $0x78] sm:$0xff]
    %v65 = vld [vmem:[%s3 + $0x80] sm:$0xff]
    %v66 = vld [vmem:[%s3 + $0x88] sm:$0xff]
    %v67 = vld [vmem:[%s3 + $0x90] sm:$0xff]
    %v68 = vld [vmem:[%s3 + $0x98] sm:$0xff]
    %v69 = vld [vmem:[%s3 + $0xa0] sm:$0xff]
    %v70 = vld [vmem:[%s3 + $0xa8] sm:$0xff]
    %v71 = vld [vmem:[%s3 + $0xb0] sm:$0xff]
    %v72 = vld [vmem:[%s3 + $0xb8] sm:$0xff]
    %v73 = vld [vmem:[%s3 + $0xc0] sm:$0xff]
    %v74 = vld [vmem:[%s3 + $0xc8] sm:$0xff]
    %v75 = vld [vmem:[%s3 + $0xd0] sm:$0xff]
    %v76 = vld [vmem:[%s3 + $0xd8] sm:$0xff]
    %v77 = vld [vmem:[%s3 + $0xe0] sm:$0xff]
    %v78 = vld [vmem:[%s3 + $0xe8] sm:$0xff]
    %v79 = vld [vmem:[%s3 + $0xf0] sm:$0xff]
    %v80 = vld [vmem:[%s3 + $0xf8] sm:$0xff]
    %v81 = vld [vmem:[#allocation2] sm:$0xff]
    %v82 = vld [vmem:[#allocation2 + $0x8] sm:$0xff]
    %v83 = vld [vmem:[#allocation2 + $0x10] sm:$0xff]
    %v84 = vld [vmem:[#allocation2 + $0x18] sm:$0xff]
    %v85 = vld [vmem:[#allocation2 + $0x20] sm:$0xff]
    %v86 = vld [vmem:[#allocation2 + $0x28] sm:$0xff]
    %v87 = vld [vmem:[#allocation2 + $0x30] sm:$0xff]
    %v88 = vld [vmem:[#allocation2 + $0x38] sm:$0xff]
    %v89 = vld [vmem:[#allocation2 + $0x40] sm:$0xff]
    %v90 = vld [vmem:[#allocation2 + $0x48] sm:$0xff]
    %v91 = vld [vmem:[#allocation2 + $0x50] sm:$0xff]
    %v92 = vld [vmem:[#allocation2 + $0x58] sm:$0xff]
    %v93 = vld [vmem:[#allocation2 + $0x60] sm:$0xff]
    %v94 = vld [vmem:[#allocation2 + $0x68] sm:$0xff]
    %v95 = vld [vmem:[#allocation2 + $0x70] sm:$0xff]
    %v96 = vld [vmem:[#allocation2 + $0x78] sm:$0xff]
    %v97 = vld [vmem:[#allocation2 + $0x80] sm:$0xff]
    %v98 = vld [vmem:[#allocation2 + $0x88] sm:$0xff]
    %v99 = vld [vmem:[#allocation2 + $0x90] sm:$0xff]
    %v100 = vld [vmem:[#allocation2 + $0x98] sm:$0xff]
    %v101 = vld [vmem:[#allocation2 + $0xa0] sm:$0xff]
    %v102 = vld [vmem:[#allocation2 + $0xa8] sm:$0xff]
    %v103 = vld [vmem:[#allocation2 + $0xb0] sm:$0xff]
    %v104 = vld [vmem:[#allocation2 + $0xb8] sm:$0xff]
    %v105 = vld [vmem:[#allocation2 + $0xc0] sm:$0xff]
    %v106 = vld [vmem:[#allocation2 + $0xc8] sm:$0xff]
    %v107 = vld [vmem:[#allocation2 + $0xd0] sm:$0xff]
    %v108 = vld [vmem:[#allocation2 + $0xd8] sm:$0xff]
    %v109 = vld [vmem:[#allocation2 + $0xe0] sm:$0xff]
    %v110 = vld [vmem:[#allocation2 + $0xe8] sm:$0xff]
    %v111 = vld [vmem:[#allocation2 + $0xf0] sm:$0xff]
    %v112 = vld [vmem:[#allocation2 + $0xf8] sm:$0xff]
    %v113 = vld [vmem:[%s0] sm:$0xff]
    %v114 = vpack.c.bf16 %v113, %v113
    %v115 = vld [vmem:[%s5] sm:$0xff]
    %v116 = vld [vmem:[%s5 + $0x8] sm:$0xff]
    %v117 = vld [vmem:[%s5 + $0x10] sm:$0xff]
    %v118 = vld [vmem:[%s5 + $0x18] sm:$0xff]
    %v151 = vunpack.c.l.b16 %v49
    %v152 = vunpack.c.h.b16 %v49
    %v153 = vunpack.c.l.b16 %v50
    %v154 = vunpack.c.h.b16 %v50
    %v155 = vunpack.c.l.b16 %v51
    %v156 = vunpack.c.h.b16 %v51
    %v157 = vunpack.c.l.b16 %v52
    %v158 = vunpack.c.h.b16 %v52
    %v159 = vunpack.c.l.b16 %v53
    %v160 = vunpack.c.h.b16 %v53
    %v161 = vunpack.c.l.b16 %v54
    %v162 = vunpack.c.h.b16 %v54
    %v163 = vunpack.c.l.b16 %v55
    %v164 = vunpack.c.h.b16 %v55
    %v165 = vunpack.c.l.b16 %v56
    %v166 = vunpack.c.h.b16 %v56
    %v167 = vunpack.c.l.b16 %v57
    %v168 = vunpack.c.h.b16 %v57
    %v169 = vunpack.c.l.b16 %v58
    %v170 = vunpack.c.h.b16 %v58
    %v171 = vunpack.c.l.b16 %v59
    %v172 = vunpack.c.h.b16 %v59
    %v173 = vunpack.c.l.b16 %v60
    %v174 = vunpack.c.h.b16 %v60
    %v175 = vunpack.c.l.b16 %v61
    %v176 = vunpack.c.h.b16 %v61
    %v177 = vunpack.c.l.b16 %v62
    %v178 = vunpack.c.h.b16 %v62
    %v179 = vunpack.c.l.b16 %v63
    %v180 = vunpack.c.h.b16 %v63
    %v181 = vunpack.c.l.b16 %v64
    %v182 = vunpack.c.h.b16 %v64
    %v183 = vunpack.c.l.b16 %v65
    %v184 = vunpack.c.h.b16 %v65
    %v185 = vunpack.c.l.b16 %v66
    %v186 = vunpack.c.h.b16 %v66
    %v187 = vunpack.c.l.b16 %v67
    %v188 = vunpack.c.h.b16 %v67
    %v189 = vunpack.c.l.b16 %v68
    %v190 = vunpack.c.h.b16 %v68
    %v191 = vunpack.c.l.b16 %v69
    %v192 = vunpack.c.h.b16 %v69
    %v193 = vunpack.c.l.b16 %v70
    %v194 = vunpack.c.h.b16 %v70
    %v195 = vunpack.c.l.b16 %v71
    %v196 = vunpack.c.h.b16 %v71
    %v197 = vunpack.c.l.b16 %v72
    %v198 = vunpack.c.h.b16 %v72
    %v199 = vunpack.c.l.b16 %v73
    %v200 = vunpack.c.h.b16 %v73
    %v201 = vunpack.c.l.b16 %v74
    %v202 = vunpack.c.h.b16 %v74
    %v203 = vunpack.c.l.b16 %v75
    %v204 = vunpack.c.h.b16 %v75
    %v205 = vunpack.c.l.b16 %v76
    %v206 = vunpack.c.h.b16 %v76
    %v207 = vunpack.c.l.b16 %v77
    %v208 = vunpack.c.h.b16 %v77
    %v209 = vunpack.c.l.b16 %v78
    %v210 = vunpack.c.h.b16 %v78
    %v211 = vunpack.c.l.b16 %v79
    %v212 = vunpack.c.h.b16 %v79
    %v213 = vunpack.c.l.b16 %v80
    %v214 = vunpack.c.h.b16 %v80
    %v215 = vpack.c.b16 %v155, %v151
    %v216 = vpack.c.b16 %v156, %v152
    %v217 = vpack.c.b16 %v157, %v153
    %v218 = vpack.c.b16 %v158, %v154
    %v219 = vpack.c.b16 %v163, %v159
    %v220 = vpack.c.b16 %v164, %v160
    %v221 = vpack.c.b16 %v165, %v161
    %v222 = vpack.c.b16 %v166, %v162
    %v223 = vpack.c.b16 %v171, %v167
    %v224 = vpack.c.b16 %v172, %v168
    %v225 = vpack.c.b16 %v173, %v169
    %v226 = vpack.c.b16 %v174, %v170
    %v227 = vpack.c.b16 %v179, %v175
    %v228 = vpack.c.b16 %v180, %v176
    %v229 = vpack.c.b16 %v181, %v177
    %v230 = vpack.c.b16 %v182, %v178
    %v231 = vpack.c.b16 %v187, %v183
    %v232 = vpack.c.b16 %v188, %v184
    %v233 = vpack.c.b16 %v189, %v185
    %v234 = vpack.c.b16 %v190, %v186
    %v235 = vpack.c.b16 %v195, %v191
    %v236 = vpack.c.b16 %v196, %v192
    %v237 = vpack.c.b16 %v197, %v193
    %v238 = vpack.c.b16 %v198, %v194
    %v239 = vpack.c.b16 %v203, %v199
    %v240 = vpack.c.b16 %v204, %v200
    %v241 = vpack.c.b16 %v205, %v201
    %v242 = vpack.c.b16 %v206, %v202
    %v243 = vpack.c.b16 %v211, %v207
    %v244 = vpack.c.b16 %v212, %v208
    %v245 = vpack.c.b16 %v213, %v209
    %v246 = vpack.c.b16 %v214, %v210
    %279 = vmatprep.subr.bf16.mxu0 %v244
    %280 = vmatpush1.bf16.msra.mxu0 %v243
    %281 = vmatprep.subr.bf16.mxu0 %v240
    %282 = vmatpush1.bf16.msra.mxu0 %v239
    %283 = vmatprep.subr.bf16.mxu0 %v236
    %284 = vmatpush1.bf16.msra.mxu0 %v235
    %285 = vmatprep.subr.bf16.mxu0 %v232
    %286 = vmatpush1.bf16.msra.mxu0 %v231
    %287 = vmatprep.subr.bf16.mxu0 %v228
    %288 = vmatpush1.bf16.msra.mxu0 %v227
    %289 = vmatprep.subr.bf16.mxu0 %v224
    %290 = vmatpush1.bf16.msra.mxu0 %v223
    %291 = vmatprep.subr.bf16.mxu0 %v220
    %292 = vmatpush1.bf16.msra.mxu0 %v219
    %293 = vmatprep.subr.bf16.mxu0 %v216
    %294 = vmatpush1.bf16.msra.mxu0 %v215
    %295 = vmatprep.subr.bf16.mxu0 0
    %296 = vmatpush2.bf16.msra.mxu0 0
    %297 = vmatprep.subr.bf16.mxu0 0
    %298 = vmatpush2.bf16.msra.mxu0 0
    %299 = vmatprep.subr.bf16.mxu0 0
    %300 = vmatpush2.bf16.msra.mxu0 0
    %301 = vmatprep.subr.bf16.mxu0 0
    %302 = vmatpush2.bf16.msra.mxu0 0
    %303 = vmatprep.subr.bf16.mxu0 0
    %304 = vmatpush2.bf16.msra.mxu0 0
    %305 = vmatprep.subr.bf16.mxu0 0
    %306 = vmatpush2.bf16.msra.mxu0 0
    %307 = vmatprep.subr.bf16.mxu0 0
    %308 = vmatpush2.bf16.msra.mxu0 0
    %309 = vmatprep.subr.bf16.mxu0 0
    %310 = vmatpush2.bf16.msra.mxu0 0
    %311 = vmatprep.mubr.bf16.mxu0 0
    %312 = vmatmul.mubr.bf16.gmra.mxu0 %v114
    %v313 = vpop.f32.mrf.mxu0
    %v314 = vadd.f32 %v115, %v313
    %v315 = vpop.f32.mrf.mxu0
    %v316 = vadd.f32 %v116, %v315
    %v317 = vpop.f32.mrf.mxu0
    %v318 = vpop.f32.mrf.mxu0
    %319 = vdwg.mxu0
    %320 = vmatprep.subr.bf16.mxu0 %v246
    %321 = vmatpush1.bf16.msra.mxu0 %v245
    %322 = vmatprep.subr.bf16.mxu0 %v242
    %323 = vmatpush1.bf16.msra.mxu0 %v241
    %324 = vmatprep.subr.bf16.mxu0 %v238
    %325 = vmatpush1.bf16.msra.mxu0 %v237
    %326 = vmatprep.subr.bf16.mxu0 %v234
    %327 = vmatpush1.bf16.msra.mxu0 %v233
    %328 = vmatprep.subr.bf16.mxu0 %v230
    %329 = vmatpush1.bf16.msra.mxu0 %v229
    %330 = vmatprep.subr.bf16.mxu0 %v226
    %331 = vmatpush1.bf16.msra.mxu0 %v225
    %332 = vmatprep.subr.bf16.mxu0 %v222
    %333 = vmatpush1.bf16.msra.mxu0 %v221
    %334 = vmatprep.subr.bf16.mxu0 %v218
    %335 = vmatpush1.bf16.msra.mxu0 %v217
    %336 = vmatprep.subr.bf16.mxu0 0
    %337 = vmatpush2.bf16.msra.mxu0 0
    %338 = vmatprep.subr.bf16.mxu0 0
    %339 = vmatpush2.bf16.msra.mxu0 0
    %340 = vmatprep.subr.bf16.mxu0 0
    %341 = vmatpush2.bf16.msra.mxu0 0
    %342 = vmatprep.subr.bf16.mxu0 0
    %343 = vmatpush2.bf16.msra.mxu0 0
    %344 = vmatprep.subr.bf16.mxu0 0
    %345 = vmatpush2.bf16.msra.mxu0 0
    %346 = vmatprep.subr.bf16.mxu0 0
    %347 = vmatpush2.bf16.msra.mxu0 0
    %348 = vmatprep.subr.bf16.mxu0 0
    %349 = vmatpush2.bf16.msra.mxu0 0
    %350 = vmatprep.subr.bf16.mxu0 0
    %351 = vmatpush2.bf16.msra.mxu0 0
    %352 = vmatprep.mubr.bf16.mxu0 0
    %353 = vmatmul.mubr.bf16.gmra.mxu0 %v114
    %v354 = vpop.f32.mrf.mxu0
    %v355 = vadd.f32 %v117, %v354
    %v356 = vpop.f32.mrf.mxu0
    %v357 = vadd.f32 %v118, %v356
    %v358 = vpop.f32.mrf.mxu0
    %v359 = vpop.f32.mrf.mxu0
    %360 = vdwg.mxu0
    %v361 = vpack.c.bf16 %v47, %v47
    %v394 = vunpack.c.l.b16 %v81
    %v395 = vunpack.c.h.b16 %v81
    %v396 = vunpack.c.l.b16 %v82
    %v397 = vunpack.c.h.b16 %v82
    %v398 = vunpack.c.l.b16 %v83
    %v399 = vunpack.c.h.b16 %v83
    %v400 = vunpack.c.l.b16 %v84
    %v401 = vunpack.c.h.b16 %v84
    %v402 = vunpack.c.l.b16 %v85
    %v403 = vunpack.c.h.b16 %v85
    %v404 = vunpack.c.l.b16 %v86
    %v405 = vunpack.c.h.b16 %v86
    %v406 = vunpack.c.l.b16 %v87
    %v407 = vunpack.c.h.b16 %v87
    %v408 = vunpack.c.l.b16 %v88
    %v409 = vunpack.c.h.b16 %v88
    %v410 = vunpack.c.l.b16 %v89
    %v411 = vunpack.c.h.b16 %v89
    %v412 = vunpack.c.l.b16 %v90
    %v413 = vunpack.c.h.b16 %v90
    %v414 = vunpack.c.l.b16 %v91
    %v415 = vunpack.c.h.b16 %v91
    %v416 = vunpack.c.l.b16 %v92
    %v417 = vunpack.c.h.b16 %v92
    %v418 = vunpack.c.l.b16 %v93
    %v419 = vunpack.c.h.b16 %v93
    %v420 = vunpack.c.l.b16 %v94
    %v421 = vunpack.c.h.b16 %v94
    %v422 = vunpack.c.l.b16 %v95
    %v423 = vunpack.c.h.b16 %v95
    %v424 = vunpack.c.l.b16 %v96
    %v425 = vunpack.c.h.b16 %v96
    %v426 = vunpack.c.l.b16 %v97
    %v427 = vunpack.c.h.b16 %v97
    %v428 = vunpack.c.l.b16 %v98
    %v429 = vunpack.c.h.b16 %v98
    %v430 = vunpack.c.l.b16 %v99
    %v431 = vunpack.c.h.b16 %v99
    %v432 = vunpack.c.l.b16 %v100
    %v433 = vunpack.c.h.b16 %v100
    %v434 = vunpack.c.l.b16 %v101
    %v435 = vunpack.c.h.b16 %v101
    %v436 = vunpack.c.l.b16 %v102
    %v437 = vunpack.c.h.b16 %v102
    %v438 = vunpack.c.l.b16 %v103
    %v439 = vunpack.c.h.b16 %v103
    %v440 = vunpack.c.l.b16 %v104
    %v441 = vunpack.c.h.b16 %v104
    %v442 = vunpack.c.l.b16 %v105
    %v443 = vunpack.c.h.b16 %v105
    %v444 = vunpack.c.l.b16 %v106
    %v445 = vunpack.c.h.b16 %v106
    %v446 = vunpack.c.l.b16 %v107
    %v447 = vunpack.c.h.b16 %v107
    %v448 = vunpack.c.l.b16 %v108
    %v449 = vunpack.c.h.b16 %v108
    %v450 = vunpack.c.l.b16 %v109
    %v451 = vunpack.c.h.b16 %v109
    %v452 = vunpack.c.l.b16 %v110
    %v453 = vunpack.c.h.b16 %v110
    %v454 = vunpack.c.l.b16 %v111
    %v455 = vunpack.c.h.b16 %v111
    %v456 = vunpack.c.l.b16 %v112
    %v457 = vunpack.c.h.b16 %v112
    %v458 = vpack.c.b16 %v398, %v394
    %v459 = vpack.c.b16 %v399, %v395
    %v460 = vpack.c.b16 %v400, %v396
    %v461 = vpack.c.b16 %v401, %v397
    %v462 = vpack.c.b16 %v406, %v402
    %v463 = vpack.c.b16 %v407, %v403
    %v464 = vpack.c.b16 %v408, %v404
    %v465 = vpack.c.b16 %v409, %v405
    %v466 = vpack.c.b16 %v414, %v410
    %v467 = vpack.c.b16 %v415, %v411
    %v468 = vpack.c.b16 %v416, %v412
    %v469 = vpack.c.b16 %v417, %v413
    %v470 = vpack.c.b16 %v422, %v418
    %v471 = vpack.c.b16 %v423, %v419
    %v472 = vpack.c.b16 %v424, %v420
    %v473 = vpack.c.b16 %v425, %v421
    %v474 = vpack.c.b16 %v430, %v426
    %v475 = vpack.c.b16 %v431, %v427
    %v476 = vpack.c.b16 %v432, %v428
    %v477 = vpack.c.b16 %v433, %v429
    %v478 = vpack.c.b16 %v438, %v434
    %v479 = vpack.c.b16 %v439, %v435
    %v480 = vpack.c.b16 %v440, %v436
    %v481 = vpack.c.b16 %v441, %v437
    %v482 = vpack.c.b16 %v446, %v442
    %v483 = vpack.c.b16 %v447, %v443
    %v484 = vpack.c.b16 %v448, %v444
    %v485 = vpack.c.b16 %v449, %v445
    %v486 = vpack.c.b16 %v454, %v450
    %v487 = vpack.c.b16 %v455, %v451
    %v488 = vpack.c.b16 %v456, %v452
    %v489 = vpack.c.b16 %v457, %v453
    %522 = vmatprep.subr.bf16.mxu0 %v487
    %523 = vmatpush1.bf16.msra.mxu0 %v486
    %524 = vmatprep.subr.bf16.mxu0 %v483
    %525 = vmatpush1.bf16.msra.mxu0 %v482
    %526 = vmatprep.subr.bf16.mxu0 %v479
    %527 = vmatpush1.bf16.msra.mxu0 %v478
    %528 = vmatprep.subr.bf16.mxu0 %v475
    %529 = vmatpush1.bf16.msra.mxu0 %v474
    %530 = vmatprep.subr.bf16.mxu0 %v471
    %531 = vmatpush1.bf16.msra.mxu0 %v470
    %532 = vmatprep.subr.bf16.mxu0 %v467
    %533 = vmatpush1.bf16.msra.mxu0 %v466
    %534 = vmatprep.subr.bf16.mxu0 %v463
    %535 = vmatpush1.bf16.msra.mxu0 %v462
    %536 = vmatprep.subr.bf16.mxu0 %v459
    %537 = vmatpush1.bf16.msra.mxu0 %v458
    %538 = vmatprep.subr.bf16.mxu0 0
    %539 = vmatpush2.bf16.msra.mxu0 0
    %540 = vmatprep.subr.bf16.mxu0 0
    %541 = vmatpush2.bf16.msra.mxu0 0
    %542 = vmatprep.subr.bf16.mxu0 0
    %543 = vmatpush2.bf16.msra.mxu0 0
    %544 = vmatprep.subr.bf16.mxu0 0
    %545 = vmatpush2.bf16.msra.mxu0 0
    %546 = vmatprep.subr.bf16.mxu0 0
    %547 = vmatpush2.bf16.msra.mxu0 0
    %548 = vmatprep.subr.bf16.mxu0 0
    %549 = vmatpush2.bf16.msra.mxu0 0
    %550 = vmatprep.subr.bf16.mxu0 0
    %551 = vmatpush2.bf16.msra.mxu0 0
    %552 = vmatprep.subr.bf16.mxu0 0
    %553 = vmatpush2.bf16.msra.mxu0 0
    %554 = vmatprep.mubr.bf16.mxu0 0
    %555 = vmatmul.mubr.bf16.gmra.mxu0 %v361
    %v556 = vpop.f32.mrf.mxu0
    %v557 = vadd.f32 0.0, %v556
    %v558 = vpop.f32.mrf.mxu0
    %v559 = vadd.f32 0.0, %v558
    %v560 = vpop.f32.mrf.mxu0
    %v561 = vpop.f32.mrf.mxu0
    %562 = vdwg.mxu0
    %563 = vmatprep.subr.bf16.mxu0 %v489
    %564 = vmatpush1.bf16.msra.mxu0 %v488
    %565 = vmatprep.subr.bf16.mxu0 %v485
    %566 = vmatpush1.bf16.msra.mxu0 %v484
    %567 = vmatprep.subr.bf16.mxu0 %v481
    %568 = vmatpush1.bf16.msra.mxu0 %v480
    %569 = vmatprep.subr.bf16.mxu0 %v477
    %570 = vmatpush1.bf16.msra.mxu0 %v476
    %571 = vmatprep.subr.bf16.mxu0 %v473
    %572 = vmatpush1.bf16.msra.mxu0 %v472
    %573 = vmatprep.subr.bf16.mxu0 %v469
    %574 = vmatpush1.bf16.msra.mxu0 %v468
    %575 = vmatprep.subr.bf16.mxu0 %v465
    %576 = vmatpush1.bf16.msra.mxu0 %v464
    %577 = vmatprep.subr.bf16.mxu0 %v461
    %578 = vmatpush1.bf16.msra.mxu0 %v460
    %579 = vmatprep.subr.bf16.mxu0 0
    %580 = vmatpush2.bf16.msra.mxu0 0
    %581 = vmatprep.subr.bf16.mxu0 0
    %582 = vmatpush2.bf16.msra.mxu0 0
    %583 = vmatprep.subr.bf16.mxu0 0
    %584 = vmatpush2.bf16.msra.mxu0 0
    %585 = vmatprep.subr.bf16.mxu0 0
    %586 = vmatpush2.bf16.msra.mxu0 0
    %587 = vmatprep.subr.bf16.mxu0 0
    %588 = vmatpush2.bf16.msra.mxu0 0
    %589 = vmatprep.subr.bf16.mxu0 0
    %590 = vmatpush2.bf16.msra.mxu0 0
    %591 = vmatprep.subr.bf16.mxu0 0
    %592 = vmatpush2.bf16.msra.mxu0 0
    %593 = vmatprep.subr.bf16.mxu0 0
    %594 = vmatpush2.bf16.msra.mxu0 0
    %595 = vmatprep.mubr.bf16.mxu0 0
    %596 = vmatmul.mubr.bf16.gmra.mxu0 %v361
    %v597 = vpop.f32.mrf.mxu0
    %v598 = vadd.f32 0.0, %v597
    %v599 = vpop.f32.mrf.mxu0
    %v600 = vadd.f32 0.0, %v599
    %v601 = vpop.f32.mrf.mxu0
    %v602 = vpop.f32.mrf.mxu0
    %603 = vdwg.mxu0
    %v604 = vadd.f32 %v314, %v557
    %v605 = vadd.f32 %v316, %v559
    %v606 = vadd.f32 %v355, %v598
    %v607 = vadd.f32 %v357, %v600
    %v608 = vtanh.pop %v604
    %v609 = vmul.f32 %v608, 0.5
    %v610 = vadd.f32 %v609, 0.5
    %v611 = vtanh.pop %v605
    %v612 = vmul.f32 %v611, 0.5
    %v613 = vadd.f32 %v612, 0.5
    %v614 = vtanh.pop %v606
    %v615 = vtanh.pop %v607
    %v616 = vmul.f32 %v615, 0.5
    %v617 = vadd.f32 %v616, 0.5
    %v618 = vmul.f32 %v613, %v48
    %v619 = vmul.f32 %v610, %v614
    %v620 = vadd.f32 %v618, %v619
    %v621 = vtanh.pop %v620
    %v622 = vmul.f32 %v617, %v621
    %s623 = scalar_lea.vmem %s0, 8
    %v624 = vld [vmem:[%s623] sm:$0xff]
    %v625 = vpack.c.bf16 %v624, %v624
    %626 = vmatprep.subr.bf16.mxu0 %v244
    %627 = vmatpush1.bf16.msra.mxu0 %v243
    %628 = vmatprep.subr.bf16.mxu0 %v240
    %629 = vmatpush1.bf16.msra.mxu0 %v239
    %630 = vmatprep.subr.bf16.mxu0 %v236
    %631 = vmatpush1.bf16.msra.mxu0 %v235
    %632 = vmatprep.subr.bf16.mxu0 %v232
    %633 = vmatpush1.bf16.msra.mxu0 %v231
    %634 = vmatprep.subr.bf16.mxu0 %v228
    %635 = vmatpush1.bf16.msra.mxu0 %v227
    %636 = vmatprep.subr.bf16.mxu0 %v224
    %637 = vmatpush1.bf16.msra.mxu0 %v223
    %638 = vmatprep.subr.bf16.mxu0 %v220
    %639 = vmatpush1.bf16.msra.mxu0 %v219
    %640 = vmatprep.subr.bf16.mxu0 %v216
    %641 = vmatpush1.bf16.msra.mxu0 %v215
    %642 = vmatprep.subr.bf16.mxu0 0
    %643 = vmatpush2.bf16.msra.mxu0 0
    %644 = vmatprep.subr.bf16.mxu0 0
    %645 = vmatpush2.bf16.msra.mxu0 0
    %646 = vmatprep.subr.bf16.mxu0 0
    %647 = vmatpush2.bf16.msra.mxu0 0
    %648 = vmatprep.subr.bf16.mxu0 0
    %649 = vmatpush2.bf16.msra.mxu0 0
    %650 = vmatprep.subr.bf16.mxu0 0
    %651 = vmatpush2.bf16.msra.mxu0 0
    %652 = vmatprep.subr.bf16.mxu0 0
    %653 = vmatpush2.bf16.msra.mxu0 0
    %654 = vmatprep.subr.bf16.mxu0 0
    %655 = vmatpush2.bf16.msra.mxu0 0
    %656 = vmatprep.subr.bf16.mxu0 0
    %657 = vmatpush2.bf16.msra.mxu0 0
    %658 = vmatprep.mubr.bf16.mxu0 0
    %659 = vmatmul.mubr.bf16.gmra.mxu0 %v625
    %v660 = vpop.f32.mrf.mxu0
    %v661 = vadd.f32 %v115, %v660
    %v662 = vpop.f32.mrf.mxu0
    %v663 = vadd.f32 %v116, %v662
    %v664 = vpop.f32.mrf.mxu0
    %v665 = vpop.f32.mrf.mxu0
    %666 = vdwg.mxu0
    %667 = vmatprep.subr.bf16.mxu0 %v246
    %668 = vmatpush1.bf16.msra.mxu0 %v245
    %669 = vmatprep.subr.bf16.mxu0 %v242
    %670 = vmatpush1.bf16.msra.mxu0 %v241
    %671 = vmatprep.subr.bf16.mxu0 %v238
    %672 = vmatpush1.bf16.msra.mxu0 %v237
    %673 = vmatprep.subr.bf16.mxu0 %v234
    %674 = vmatpush1.bf16.msra.mxu0 %v233
    %675 = vmatprep.subr.bf16.mxu0 %v230
    %676 = vmatpush1.bf16.msra.mxu0 %v229
    %677 = vmatprep.subr.bf16.mxu0 %v226
    %678 = vmatpush1.bf16.msra.mxu0 %v225
    %679 = vmatprep.subr.bf16.mxu0 %v222
    %680 = vmatpush1.bf16.msra.mxu0 %v221
    %681 = vmatprep.subr.bf16.mxu0 %v218
    %682 = vmatpush1.bf16.msra.mxu0 %v217
    %683 = vmatprep.subr.bf16.mxu0 0
    %684 = vmatpush2.bf16.msra.mxu0 0
    %685 = vmatprep.subr.bf16.mxu0 0
    %686 = vmatpush2.bf16.msra.mxu0 0
    %687 = vmatprep.subr.bf16.mxu0 0
    %688 = vmatpush2.bf16.msra.mxu0 0
    %689 = vmatprep.subr.bf16.mxu0 0
    %690 = vmatpush2.bf16.msra.mxu0 0
    %691 = vmatprep.subr.bf16.mxu0 0
    %692 = vmatpush2.bf16.msra.mxu0 0
    %693 = vmatprep.subr.bf16.mxu0 0
    %694 = vmatpush2.bf16.msra.mxu0 0
    %695 = vmatprep.subr.bf16.mxu0 0
    %696 = vmatpush2.bf16.msra.mxu0 0
    %697 = vmatprep.subr.bf16.mxu0 0
    %698 = vmatpush2.bf16.msra.mxu0 0
    %699 = vmatprep.mubr.bf16.mxu0 0
    %700 = vmatmul.mubr.bf16.gmra.mxu0 %v625
    %v701 = vpop.f32.mrf.mxu0
    %v702 = vadd.f32 %v117, %v701
    %v703 = vpop.f32.mrf.mxu0
    %v704 = vadd.f32 %v118, %v703
    %v705 = vpop.f32.mrf.mxu0
    %v706 = vpop.f32.mrf.mxu0
    %707 = vdwg.mxu0
    %v708 = vpack.c.bf16 %v622, %v622
    %709 = vmatprep.subr.bf16.mxu0 %v487
    %710 = vmatpush1.bf16.msra.mxu0 %v486
    %711 = vmatprep.subr.bf16.mxu0 %v483
    %712 = vmatpush1.bf16.msra.mxu0 %v482
    %713 = vmatprep.subr.bf16.mxu0 %v479
    %714 = vmatpush1.bf16.msra.mxu0 %v478
    %715 = vmatprep.subr.bf16.mxu0 %v475
    %716 = vmatpush1.bf16.msra.mxu0 %v474
    %717 = vmatprep.subr.bf16.mxu0 %v471
    %718 = vmatpush1.bf16.msra.mxu0 %v470
    %719 = vmatprep.subr.bf16.mxu0 %v467
    %720 = vmatpush1.bf16.msra.mxu0 %v466
    %721 = vmatprep.subr.bf16.mxu0 %v463
    %722 = vmatpush1.bf16.msra.mxu0 %v462
    %723 = vmatprep.subr.bf16.mxu0 %v459
    %724 = vmatpush1.bf16.msra.mxu0 %v458
    %725 = vmatprep.subr.bf16.mxu0 0
    %726 = vmatpush2.bf16.msra.mxu0 0
    %727 = vmatprep.subr.bf16.mxu0 0
    %728 = vmatpush2.bf16.msra.mxu0 0
    %729 = vmatprep.subr.bf16.mxu0 0
    %730 = vmatpush2.bf16.msra.mxu0 0
    %731 = vmatprep.subr.bf16.mxu0 0
    %732 = vmatpush2.bf16.msra.mxu0 0
    %733 = vmatprep.subr.bf16.mxu0 0
    %734 = vmatpush2.bf16.msra.mxu0 0
    %735 = vmatprep.subr.bf16.mxu0 0
    %736 = vmatpush2.bf16.msra.mxu0 0
    %737 = vmatprep.subr.bf16.mxu0 0
    %738 = vmatpush2.bf16.msra.mxu0 0
    %739 = vmatprep.subr.bf16.mxu0 0
    %740 = vmatpush2.bf16.msra.mxu0 0
    %741 = vmatprep.mubr.bf16.mxu0 0
    %742 = vmatmul.mubr.bf16.gmra.mxu0 %v708
    %v743 = vpop.f32.mrf.mxu0
    %v744 = vadd.f32 0.0, %v743
    %v745 = vpop.f32.mrf.mxu0
    %v746 = vadd.f32 0.0, %v745
    %v747 = vpop.f32.mrf.mxu0
    %v748 = vpop.f32.mrf.mxu0
    %749 = vdwg.mxu0
    %750 = vmatprep.subr.bf16.mxu0 %v489
    %751 = vmatpush1.bf16.msra.mxu0 %v488
    %752 = vmatprep.subr.bf16.mxu0 %v485
    %753 = vmatpush1.bf16.msra.mxu0 %v484
    %754 = vmatprep.subr.bf16.mxu0 %v481
    %755 = vmatpush1.bf16.msra.mxu0 %v480
    %756 = vmatprep.subr.bf16.mxu0 %v477
    %757 = vmatpush1.bf16.msra.mxu0 %v476
    %758 = vmatprep.subr.bf16.mxu0 %v473
    %759 = vmatpush1.bf16.msra.mxu0 %v472
    %760 = vmatprep.subr.bf16.mxu0 %v469
    %761 = vmatpush1.bf16.msra.mxu0 %v468
    %762 = vmatprep.subr.bf16.mxu0 %v465
    %763 = vmatpush1.bf16.msra.mxu0 %v464
    %764 = vmatprep.subr.bf16.mxu0 %v461
    %765 = vmatpush1.bf16.msra.mxu0 %v460
    %766 = vmatprep.subr.bf16.mxu0 0
    %767 = vmatpush2.bf16.msra.mxu0 0
    %768 = vmatprep.subr.bf16.mxu0 0
    %769 = vmatpush2.bf16.msra.mxu0 0
    %770 = vmatprep.subr.bf16.mxu0 0
    %771 = vmatpush2.bf16.msra.mxu0 0
    %772 = vmatprep.subr.bf16.mxu0 0
    %773 = vmatpush2.bf16.msra.mxu0 0
    %774 = vmatprep.subr.bf16.mxu0 0
    %775 = vmatpush2.bf16.msra.mxu0 0
    %776 = vmatprep.subr.bf16.mxu0 0
    %777 = vmatpush2.bf16.msra.mxu0 0
    %778 = vmatprep.subr.bf16.mxu0 0
    %779 = vmatpush2.bf16.msra.mxu0 0
    %780 = vmatprep.subr.bf16.mxu0 0
    %781 = vmatpush2.bf16.msra.mxu0 0
    %782 = vmatprep.mubr.bf16.mxu0 0
    %783 = vmatmul.mubr.bf16.gmra.mxu0 %v708
    %v784 = vpop.f32.mrf.mxu0
    %v785 = vadd.f32 0.0, %v784
    %v786 = vpop.f32.mrf.mxu0
    %v787 = vadd.f32 0.0, %v786
    %v788 = vpop.f32.mrf.mxu0
    %v789 = vpop.f32.mrf.mxu0
    %790 = vdwg.mxu0
    %v791 = vadd.f32 %v661, %v744
    %v792 = vadd.f32 %v663, %v746
    %v793 = vadd.f32 %v702, %v785
    %v794 = vadd.f32 %v704, %v787
    %v795 = vtanh.pop %v791
    %v796 = vmul.f32 %v795, 0.5
    %v797 = vadd.f32 %v796, 0.5
    %v798 = vtanh.pop %v792
    %v799 = vmul.f32 %v798, 0.5
    %v800 = vadd.f32 %v799, 0.5
    %v801 = vtanh.pop %v793
    %v802 = vtanh.pop %v794
    %v803 = vmul.f32 %v802, 0.5
    %v804 = vadd.f32 %v803, 0.5
    %v805 = vmul.f32 %v800, %v620
    %v806 = vmul.f32 %v797, %v801
    %v807 = vadd.f32 %v805, %v806
    %v808 = vtanh.pop %v807
    %v809 = vmul.f32 %v804, %v808
    %s810 = scalar_lea.vmem %s0, 16
    %v811 = vld [vmem:[%s810] sm:$0xff]
    %v812 = vpack.c.bf16 %v811, %v811
    %813 = vmatprep.subr.bf16.mxu0 %v244
    %814 = vmatpush1.bf16.msra.mxu0 %v243
    %815 = vmatprep.subr.bf16.mxu0 %v240
    %816 = vmatpush1.bf16.msra.mxu0 %v239
    %817 = vmatprep.subr.bf16.mxu0 %v236
    %818 = vmatpush1.bf16.msra.mxu0 %v235
    %819 = vmatprep.subr.bf16.mxu0 %v232
    %820 = vmatpush1.bf16.msra.mxu0 %v231
    %821 = vmatprep.subr.bf16.mxu0 %v228
    %822 = vmatpush1.bf16.msra.mxu0 %v227
    %823 = vmatprep.subr.bf16.mxu0 %v224
    %824 = vmatpush1.bf16.msra.mxu0 %v223
    %825 = vmatprep.subr.bf16.mxu0 %v220
    %826 = vmatpush1.bf16.msra.mxu0 %v219
    %827 = vmatprep.subr.bf16.mxu0 %v216
    %828 = vmatpush1.bf16.msra.mxu0 %v215
    %829 = vmatprep.subr.bf16.mxu0 0
    %830 = vmatpush2.bf16.msra.mxu0 0
    %831 = vmatprep.subr.bf16.mxu0 0
    %832 = vmatpush2.bf16.msra.mxu0 0
    %833 = vmatprep.subr.bf16.mxu0 0
    %834 = vmatpush2.bf16.msra.mxu0 0
    %835 = vmatprep.subr.bf16.mxu0 0
    %836 = vmatpush2.bf16.msra.mxu0 0
    %837 = vmatprep.subr.bf16.mxu0 0
    %838 = vmatpush2.bf16.msra.mxu0 0
    %839 = vmatprep.subr.bf16.mxu0 0
    %840 = vmatpush2.bf16.msra.mxu0 0
    %841 = vmatprep.subr.bf16.mxu0 0
    %842 = vmatpush2.bf16.msra.mxu0 0
    %843 = vmatprep.subr.bf16.mxu0 0
    %844 = vmatpush2.bf16.msra.mxu0 0
    %845 = vmatprep.mubr.bf16.mxu0 0
    %846 = vmatmul.mubr.bf16.gmra.mxu0 %v812
    %v847 = vpop.f32.mrf.mxu0
    %v848 = vadd.f32 %v115, %v847
    %v849 = vpop.f32.mrf.mxu0
    %v850 = vadd.f32 %v116, %v849
    %v851 = vpop.f32.mrf.mxu0
    %v852 = vpop.f32.mrf.mxu0
    %853 = vdwg.mxu0
    %854 = vmatprep.subr.bf16.mxu0 %v246
    %855 = vmatpush1.bf16.msra.mxu0 %v245
    %856 = vmatprep.subr.bf16.mxu0 %v242
    %857 = vmatpush1.bf16.msra.mxu0 %v241
    %858 = vmatprep.subr.bf16.mxu0 %v238
    %859 = vmatpush1.bf16.msra.mxu0 %v237
    %860 = vmatprep.subr.bf16.mxu0 %v234
    %861 = vmatpush1.bf16.msra.mxu0 %v233
    %862 = vmatprep.subr.bf16.mxu0 %v230
    %863 = vmatpush1.bf16.msra.mxu0 %v229
    %864 = vmatprep.subr.bf16.mxu0 %v226
    %865 = vmatpush1.bf16.msra.mxu0 %v225
    %866 = vmatprep.subr.bf16.mxu0 %v222
    %867 = vmatpush1.bf16.msra.mxu0 %v221
    %868 = vmatprep.subr.bf16.mxu0 %v218
    %869 = vmatpush1.bf16.msra.mxu0 %v217
    %870 = vmatprep.subr.bf16.mxu0 0
    %871 = vmatpush2.bf16.msra.mxu0 0
    %872 = vmatprep.subr.bf16.mxu0 0
    %873 = vmatpush2.bf16.msra.mxu0 0
    %874 = vmatprep.subr.bf16.mxu0 0
    %875 = vmatpush2.bf16.msra.mxu0 0
    %876 = vmatprep.subr.bf16.mxu0 0
    %877 = vmatpush2.bf16.msra.mxu0 0
    %878 = vmatprep.subr.bf16.mxu0 0
    %879 = vmatpush2.bf16.msra.mxu0 0
    %880 = vmatprep.subr.bf16.mxu0 0
    %881 = vmatpush2.bf16.msra.mxu0 0
    %882 = vmatprep.subr.bf16.mxu0 0
    %883 = vmatpush2.bf16.msra.mxu0 0
    %884 = vmatprep.subr.bf16.mxu0 0
    %885 = vmatpush2.bf16.msra.mxu0 0
    %886 = vmatprep.mubr.bf16.mxu0 0
    %887 = vmatmul.mubr.bf16.gmra.mxu0 %v812
    %v888 = vpop.f32.mrf.mxu0
    %v889 = vadd.f32 %v117, %v888
    %v890 = vpop.f32.mrf.mxu0
    %v891 = vadd.f32 %v118, %v890
    %v892 = vpop.f32.mrf.mxu0
    %v893 = vpop.f32.mrf.mxu0
    %894 = vdwg.mxu0
    %v895 = vpack.c.bf16 %v809, %v809
    %896 = vmatprep.subr.bf16.mxu0 %v487
    %897 = vmatpush1.bf16.msra.mxu0 %v486
    %898 = vmatprep.subr.bf16.mxu0 %v483
    %899 = vmatpush1.bf16.msra.mxu0 %v482
    %900 = vmatprep.subr.bf16.mxu0 %v479
    %901 = vmatpush1.bf16.msra.mxu0 %v478
    %902 = vmatprep.subr.bf16.mxu0 %v475
    %903 = vmatpush1.bf16.msra.mxu0 %v474
    %904 = vmatprep.subr.bf16.mxu0 %v471
    %905 = vmatpush1.bf16.msra.mxu0 %v470
    %906 = vmatprep.subr.bf16.mxu0 %v467
    %907 = vmatpush1.bf16.msra.mxu0 %v466
    %908 = vmatprep.subr.bf16.mxu0 %v463
    %909 = vmatpush1.bf16.msra.mxu0 %v462
    %910 = vmatprep.subr.bf16.mxu0 %v459
    %911 = vmatpush1.bf16.msra.mxu0 %v458
    %912 = vmatprep.subr.bf16.mxu0 0
    %913 = vmatpush2.bf16.msra.mxu0 0
    %914 = vmatprep.subr.bf16.mxu0 0
    %915 = vmatpush2.bf16.msra.mxu0 0
    %916 = vmatprep.subr.bf16.mxu0 0
    %917 = vmatpush2.bf16.msra.mxu0 0
    %918 = vmatprep.subr.bf16.mxu0 0
    %919 = vmatpush2.bf16.msra.mxu0 0
    %920 = vmatprep.subr.bf16.mxu0 0
    %921 = vmatpush2.bf16.msra.mxu0 0
    %922 = vmatprep.subr.bf16.mxu0 0
    %923 = vmatpush2.bf16.msra.mxu0 0
    %924 = vmatprep.subr.bf16.mxu0 0
    %925 = vmatpush2.bf16.msra.mxu0 0
    %926 = vmatprep.subr.bf16.mxu0 0
    %927 = vmatpush2.bf16.msra.mxu0 0
    %928 = vmatprep.mubr.bf16.mxu0 0
    %929 = vmatmul.mubr.bf16.gmra.mxu0 %v895
    %v930 = vpop.f32.mrf.mxu0
    %v931 = vadd.f32 0.0, %v930
    %v932 = vpop.f32.mrf.mxu0
    %v933 = vadd.f32 0.0, %v932
    %v934 = vpop.f32.mrf.mxu0
    %v935 = vpop.f32.mrf.mxu0
    %936 = vdwg.mxu0
    %937 = vmatprep.subr.bf16.mxu0 %v489
    %938 = vmatpush1.bf16.msra.mxu0 %v488
    %939 = vmatprep.subr.bf16.mxu0 %v485
    %940 = vmatpush1.bf16.msra.mxu0 %v484
    %941 = vmatprep.subr.bf16.mxu0 %v481
    %942 = vmatpush1.bf16.msra.mxu0 %v480
    %943 = vmatprep.subr.bf16.mxu0 %v477
    %944 = vmatpush1.bf16.msra.mxu0 %v476
    %945 = vmatprep.subr.bf16.mxu0 %v473
    %946 = vmatpush1.bf16.msra.mxu0 %v472
    %947 = vmatprep.subr.bf16.mxu0 %v469
    %948 = vmatpush1.bf16.msra.mxu0 %v468
    %949 = vmatprep.subr.bf16.mxu0 %v465
    %950 = vmatpush1.bf16.msra.mxu0 %v464
    %951 = vmatprep.subr.bf16.mxu0 %v461
    %952 = vmatpush1.bf16.msra.mxu0 %v460
    %953 = vmatprep.subr.bf16.mxu0 0
    %954 = vmatpush2.bf16.msra.mxu0 0
    %955 = vmatprep.subr.bf16.mxu0 0
    %956 = vmatpush2.bf16.msra.mxu0 0
    %957 = vmatprep.subr.bf16.mxu0 0
    %958 = vmatpush2.bf16.msra.mxu0 0
    %959 = vmatprep.subr.bf16.mxu0 0
    %960 = vmatpush2.bf16.msra.mxu0 0
    %961 = vmatprep.subr.bf16.mxu0 0
    %962 = vmatpush2.bf16.msra.mxu0 0
    %963 = vmatprep.subr.bf16.mxu0 0
    %964 = vmatpush2.bf16.msra.mxu0 0
    %965 = vmatprep.subr.bf16.mxu0 0
    %966 = vmatpush2.bf16.msra.mxu0 0
    %967 = vmatprep.subr.bf16.mxu0 0
    %968 = vmatpush2.bf16.msra.mxu0 0
    %969 = vmatprep.mubr.bf16.mxu0 0
    %970 = vmatmul.mubr.bf16.gmra.mxu0 %v895
    %v971 = vpop.f32.mrf.mxu0
    %v972 = vadd.f32 0.0, %v971
    %v973 = vpop.f32.mrf.mxu0
    %v974 = vadd.f32 0.0, %v973
    %v975 = vpop.f32.mrf.mxu0
    %v976 = vpop.f32.mrf.mxu0
    %977 = vdwg.mxu0
    %v978 = vadd.f32 %v848, %v931
    %v979 = vadd.f32 %v850, %v933
    %v980 = vadd.f32 %v889, %v972
    %v981 = vadd.f32 %v891, %v974
    %v982 = vtanh.pop %v978
    %v983 = vmul.f32 %v982, 0.5
    %v984 = vadd.f32 %v983, 0.5
    %v985 = vtanh.pop %v979
    %v986 = vmul.f32 %v985, 0.5
    %v987 = vadd.f32 %v986, 0.5
    %v988 = vtanh.pop %v980
    %v989 = vtanh.pop %v981
    %v990 = vmul.f32 %v989, 0.5
    %v991 = vadd.f32 %v990, 0.5
    %v992 = vmul.f32 %v987, %v807
    %v993 = vmul.f32 %v984, %v988
    %v994 = vadd.f32 %v992, %v993
    %v995 = vtanh.pop %v994
    %v996 = vmul.f32 %v991, %v995
    %s997 = scalar_lea.vmem %s0, 24
    %v998 = vld [vmem:[%s997] sm:$0xff]
    %v999 = vpack.c.bf16 %v998, %v998
    %1000 = vmatprep.subr.bf16.mxu0 %v244
    %1001 = vmatpush1.bf16.msra.mxu0 %v243
    %1002 = vmatprep.subr.bf16.mxu0 %v240
    %1003 = vmatpush1.bf16.msra.mxu0 %v239
    %1004 = vmatprep.subr.bf16.mxu0 %v236
    %1005 = vmatpush1.bf16.msra.mxu0 %v235
    %1006 = vmatprep.subr.bf16.mxu0 %v232
    %1007 = vmatpush1.bf16.msra.mxu0 %v231
    %1008 = vmatprep.subr.bf16.mxu0 %v228
    %1009 = vmatpush1.bf16.msra.mxu0 %v227
    %1010 = vmatprep.subr.bf16.mxu0 %v224
    %1011 = vmatpush1.bf16.msra.mxu0 %v223
    %1012 = vmatprep.subr.bf16.mxu0 %v220
    %1013 = vmatpush1.bf16.msra.mxu0 %v219
    %1014 = vmatprep.subr.bf16.mxu0 %v216
    %1015 = vmatpush1.bf16.msra.mxu0 %v215
    %1016 = vmatprep.subr.bf16.mxu0 0
    %1017 = vmatpush2.bf16.msra.mxu0 0
    %1018 = vmatprep.subr.bf16.mxu0 0
    %1019 = vmatpush2.bf16.msra.mxu0 0
    %1020 = vmatprep.subr.bf16.mxu0 0
    %1021 = vmatpush2.bf16.msra.mxu0 0
    %1022 = vmatprep.subr.bf16.mxu0 0
    %1023 = vmatpush2.bf16.msra.mxu0 0
    %1024 = vmatprep.subr.bf16.mxu0 0
    %1025 = vmatpush2.bf16.msra.mxu0 0
    %1026 = vmatprep.subr.bf16.mxu0 0
    %1027 = vmatpush2.bf16.msra.mxu0 0
    %1028 = vmatprep.subr.bf16.mxu0 0
    %1029 = vmatpush2.bf16.msra.mxu0 0
    %1030 = vmatprep.subr.bf16.mxu0 0
    %1031 = vmatpush2.bf16.msra.mxu0 0
    %1032 = vmatprep.mubr.bf16.mxu0 0
    %1033 = vmatmul.mubr.bf16.gmra.mxu0 %v999
    %v1034 = vpop.f32.mrf.mxu0
    %v1035 = vadd.f32 %v115, %v1034
    %v1036 = vpop.f32.mrf.mxu0
    %v1037 = vadd.f32 %v116, %v1036
    %v1038 = vpop.f32.mrf.mxu0
    %v1039 = vpop.f32.mrf.mxu0
    %1040 = vdwg.mxu0
    %1041 = vmatprep.subr.bf16.mxu0 %v246
    %1042 = vmatpush1.bf16.msra.mxu0 %v245
    %1043 = vmatprep.subr.bf16.mxu0 %v242
    %1044 = vmatpush1.bf16.msra.mxu0 %v241
    %1045 = vmatprep.subr.bf16.mxu0 %v238
    %1046 = vmatpush1.bf16.msra.mxu0 %v237
    %1047 = vmatprep.subr.bf16.mxu0 %v234
    %1048 = vmatpush1.bf16.msra.mxu0 %v233
    %1049 = vmatprep.subr.bf16.mxu0 %v230
    %1050 = vmatpush1.bf16.msra.mxu0 %v229
    %1051 = vmatprep.subr.bf16.mxu0 %v226
    %1052 = vmatpush1.bf16.msra.mxu0 %v225
    %1053 = vmatprep.subr.bf16.mxu0 %v222
    %1054 = vmatpush1.bf16.msra.mxu0 %v221
    %1055 = vmatprep.subr.bf16.mxu0 %v218
    %1056 = vmatpush1.bf16.msra.mxu0 %v217
    %1057 = vmatprep.subr.bf16.mxu0 0
    %1058 = vmatpush2.bf16.msra.mxu0 0
    %1059 = vmatprep.subr.bf16.mxu0 0
    %1060 = vmatpush2.bf16.msra.mxu0 0
    %1061 = vmatprep.subr.bf16.mxu0 0
    %1062 = vmatpush2.bf16.msra.mxu0 0
    %1063 = vmatprep.subr.bf16.mxu0 0
    %1064 = vmatpush2.bf16.msra.mxu0 0
    %1065 = vmatprep.subr.bf16.mxu0 0
    %1066 = vmatpush2.bf16.msra.mxu0 0
    %1067 = vmatprep.subr.bf16.mxu0 0
    %1068 = vmatpush2.bf16.msra.mxu0 0
    %1069 = vmatprep.subr.bf16.mxu0 0
    %1070 = vmatpush2.bf16.msra.mxu0 0
    %1071 = vmatprep.subr.bf16.mxu0 0
    %1072 = vmatpush2.bf16.msra.mxu0 0
    %1073 = vmatprep.mubr.bf16.mxu0 0
    %1074 = vmatmul.mubr.bf16.gmra.mxu0 %v999
    %v1075 = vpop.f32.mrf.mxu0
    %v1076 = vadd.f32 %v117, %v1075
    %v1077 = vpop.f32.mrf.mxu0
    %v1078 = vadd.f32 %v118, %v1077
    %v1079 = vpop.f32.mrf.mxu0
    %v1080 = vpop.f32.mrf.mxu0
    %1081 = vdwg.mxu0
    %v1082 = vpack.c.bf16 %v996, %v996
    %1083 = vmatprep.subr.bf16.mxu0 %v487
    %1084 = vmatpush1.bf16.msra.mxu0 %v486
    %1085 = vmatprep.subr.bf16.mxu0 %v483
    %1086 = vmatpush1.bf16.msra.mxu0 %v482
    %1087 = vmatprep.subr.bf16.mxu0 %v479
    %1088 = vmatpush1.bf16.msra.mxu0 %v478
    %1089 = vmatprep.subr.bf16.mxu0 %v475
    %1090 = vmatpush1.bf16.msra.mxu0 %v474
    %1091 = vmatprep.subr.bf16.mxu0 %v471
    %1092 = vmatpush1.bf16.msra.mxu0 %v470
    %1093 = vmatprep.subr.bf16.mxu0 %v467
    %1094 = vmatpush1.bf16.msra.mxu0 %v466
    %1095 = vmatprep.subr.bf16.mxu0 %v463
    %1096 = vmatpush1.bf16.msra.mxu0 %v462
    %1097 = vmatprep.subr.bf16.mxu0 %v459
    %1098 = vmatpush1.bf16.msra.mxu0 %v458
    %1099 = vmatprep.subr.bf16.mxu0 0
    %1100 = vmatpush2.bf16.msra.mxu0 0
    %1101 = vmatprep.subr.bf16.mxu0 0
    %1102 = vmatpush2.bf16.msra.mxu0 0
    %1103 = vmatprep.subr.bf16.mxu0 0
    %1104 = vmatpush2.bf16.msra.mxu0 0
    %1105 = vmatprep.subr.bf16.mxu0 0
    %1106 = vmatpush2.bf16.msra.mxu0 0
    %1107 = vmatprep.subr.bf16.mxu0 0
    %1108 = vmatpush2.bf16.msra.mxu0 0
    %1109 = vmatprep.subr.bf16.mxu0 0
    %1110 = vmatpush2.bf16.msra.mxu0 0
    %1111 = vmatprep.subr.bf16.mxu0 0
    %1112 = vmatpush2.bf16.msra.mxu0 0
    %1113 = vmatprep.subr.bf16.mxu0 0
    %1114 = vmatpush2.bf16.msra.mxu0 0
    %1115 = vmatprep.mubr.bf16.mxu0 0
    %1116 = vmatmul.mubr.bf16.gmra.mxu0 %v1082
    %v1117 = vpop.f32.mrf.mxu0
    %v1118 = vadd.f32 0.0, %v1117
    %v1119 = vpop.f32.mrf.mxu0
    %v1120 = vadd.f32 0.0, %v1119
    %v1121 = vpop.f32.mrf.mxu0
    %v1122 = vpop.f32.mrf.mxu0
    %1123 = vdwg.mxu0
    %1124 = vmatprep.subr.bf16.mxu0 %v489
    %1125 = vmatpush1.bf16.msra.mxu0 %v488
    %1126 = vmatprep.subr.bf16.mxu0 %v485
    %1127 = vmatpush1.bf16.msra.mxu0 %v484
    %1128 = vmatprep.subr.bf16.mxu0 %v481
    %1129 = vmatpush1.bf16.msra.mxu0 %v480
    %1130 = vmatprep.subr.bf16.mxu0 %v477
    %1131 = vmatpush1.bf16.msra.mxu0 %v476
    %1132 = vmatprep.subr.bf16.mxu0 %v473
    %1133 = vmatpush1.bf16.msra.mxu0 %v472
    %1134 = vmatprep.subr.bf16.mxu0 %v469
    %1135 = vmatpush1.bf16.msra.mxu0 %v468
    %1136 = vmatprep.subr.bf16.mxu0 %v465
    %1137 = vmatpush1.bf16.msra.mxu0 %v464
    %1138 = vmatprep.subr.bf16.mxu0 %v461
    %1139 = vmatpush1.bf16.msra.mxu0 %v460
    %1140 = vmatprep.subr.bf16.mxu0 0
    %1141 = vmatpush2.bf16.msra.mxu0 0
    %1142 = vmatprep.subr.bf16.mxu0 0
    %1143 = vmatpush2.bf16.msra.mxu0 0
    %1144 = vmatprep.subr.bf16.mxu0 0
    %1145 = vmatpush2.bf16.msra.mxu0 0
    %1146 = vmatprep.subr.bf16.mxu0 0
    %1147 = vmatpush2.bf16.msra.mxu0 0
    %1148 = vmatprep.subr.bf16.mxu0 0
    %1149 = vmatpush2.bf16.msra.mxu0 0
    %1150 = vmatprep.subr.bf16.mxu0 0
    %1151 = vmatpush2.bf16.msra.mxu0 0
    %1152 = vmatprep.subr.bf16.mxu0 0
    %1153 = vmatpush2.bf16.msra.mxu0 0
    %1154 = vmatprep.subr.bf16.mxu0 0
    %1155 = vmatpush2.bf16.msra.mxu0 0
    %1156 = vmatprep.mubr.bf16.mxu0 0
    %1157 = vmatmul.mubr.bf16.gmra.mxu0 %v1082
    %v1158 = vpop.f32.mrf.mxu0
    %v1159 = vadd.f32 0.0, %v1158
    %v1160 = vpop.f32.mrf.mxu0
    %v1161 = vadd.f32 0.0, %v1160
    %v1162 = vpop.f32.mrf.mxu0
    %v1163 = vpop.f32.mrf.mxu0
    %1164 = vdwg.mxu0
    %v1165 = vadd.f32 %v1035, %v1118
    %v1166 = vadd.f32 %v1037, %v1120
    %v1167 = vadd.f32 %v1076, %v1159
    %v1168 = vadd.f32 %v1078, %v1161
    %v1169 = vtanh.pop %v1165
    %v1170 = vmul.f32 %v1169, 0.5
    %v1171 = vadd.f32 %v1170, 0.5
    %v1172 = vtanh.pop %v1166
    %v1173 = vmul.f32 %v1172, 0.5
    %v1174 = vadd.f32 %v1173, 0.5
    %v1175 = vtanh.pop %v1167
    %v1176 = vtanh.pop %v1168
    %v1177 = vmul.f32 %v1176, 0.5
    %v1178 = vadd.f32 %v1177, 0.5
    %v1179 = vmul.f32 %v1174, %v994
    %v1180 = vmul.f32 %v1171, %v1175
    %v1181 = vadd.f32 %v1179, %v1180
    %v1182 = vtanh.pop %v1181
    %v1183 = vmul.f32 %v1178, %v1182
    %s1184 = scalar_lea.vmem %s0, 32
    %v1185 = vld [vmem:[%s1184] sm:$0xff]
    %v1186 = vpack.c.bf16 %v1185, %v1185
    %1187 = vmatprep.subr.bf16.mxu0 %v244
    %1188 = vmatpush1.bf16.msra.mxu0 %v243
    %1189 = vmatprep.subr.bf16.mxu0 %v240
    %1190 = vmatpush1.bf16.msra.mxu0 %v239
    %1191 = vmatprep.subr.bf16.mxu0 %v236
    %1192 = vmatpush1.bf16.msra.mxu0 %v235
    %1193 = vmatprep.subr.bf16.mxu0 %v232
    %1194 = vmatpush1.bf16.msra.mxu0 %v231
    %1195 = vmatprep.subr.bf16.mxu0 %v228
    %1196 = vmatpush1.bf16.msra.mxu0 %v227
    %1197 = vmatprep.subr.bf16.mxu0 %v224
    %1198 = vmatpush1.bf16.msra.mxu0 %v223
    %1199 = vmatprep.subr.bf16.mxu0 %v220
    %1200 = vmatpush1.bf16.msra.mxu0 %v219
    %1201 = vmatprep.subr.bf16.mxu0 %v216
    %1202 = vmatpush1.bf16.msra.mxu0 %v215
    %1203 = vmatprep.subr.bf16.mxu0 0
    %1204 = vmatpush2.bf16.msra.mxu0 0
    %1205 = vmatprep.subr.bf16.mxu0 0
    %1206 = vmatpush2.bf16.msra.mxu0 0
    %1207 = vmatprep.subr.bf16.mxu0 0
    %1208 = vmatpush2.bf16.msra.mxu0 0
    %1209 = vmatprep.subr.bf16.mxu0 0
    %1210 = vmatpush2.bf16.msra.mxu0 0
    %1211 = vmatprep.subr.bf16.mxu0 0
    %1212 = vmatpush2.bf16.msra.mxu0 0
    %1213 = vmatprep.subr.bf16.mxu0 0
    %1214 = vmatpush2.bf16.msra.mxu0 0
    %1215 = vmatprep.subr.bf16.mxu0 0
    %1216 = vmatpush2.bf16.msra.mxu0 0
    %1217 = vmatprep.subr.bf16.mxu0 0
    %1218 = vmatpush2.bf16.msra.mxu0 0
    %1219 = vmatprep.mubr.bf16.mxu0 0
    %1220 = vmatmul.mubr.bf16.gmra.mxu0 %v1186
    %v1221 = vpop.f32.mrf.mxu0
    %v1222 = vadd.f32 %v115, %v1221
    %v1223 = vpop.f32.mrf.mxu0
    %v1224 = vadd.f32 %v116, %v1223
    %v1225 = vpop.f32.mrf.mxu0
    %v1226 = vpop.f32.mrf.mxu0
    %1227 = vdwg.mxu0
    %1228 = vmatprep.subr.bf16.mxu0 %v246
    %1229 = vmatpush1.bf16.msra.mxu0 %v245
    %1230 = vmatprep.subr.bf16.mxu0 %v242
    %1231 = vmatpush1.bf16.msra.mxu0 %v241
    %1232 = vmatprep.subr.bf16.mxu0 %v238
    %1233 = vmatpush1.bf16.msra.mxu0 %v237
    %1234 = vmatprep.subr.bf16.mxu0 %v234
    %1235 = vmatpush1.bf16.msra.mxu0 %v233
    %1236 = vmatprep.subr.bf16.mxu0 %v230
    %1237 = vmatpush1.bf16.msra.mxu0 %v229
    %1238 = vmatprep.subr.bf16.mxu0 %v226
    %1239 = vmatpush1.bf16.msra.mxu0 %v225
    %1240 = vmatprep.subr.bf16.mxu0 %v222
    %1241 = vmatpush1.bf16.msra.mxu0 %v221
    %1242 = vmatprep.subr.bf16.mxu0 %v218
    %1243 = vmatpush1.bf16.msra.mxu0 %v217
    %1244 = vmatprep.subr.bf16.mxu0 0
    %1245 = vmatpush2.bf16.msra.mxu0 0
    %1246 = vmatprep.subr.bf16.mxu0 0
    %1247 = vmatpush2.bf16.msra.mxu0 0
    %1248 = vmatprep.subr.bf16.mxu0 0
    %1249 = vmatpush2.bf16.msra.mxu0 0
    %1250 = vmatprep.subr.bf16.mxu0 0
    %1251 = vmatpush2.bf16.msra.mxu0 0
    %1252 = vmatprep.subr.bf16.mxu0 0
    %1253 = vmatpush2.bf16.msra.mxu0 0
    %1254 = vmatprep.subr.bf16.mxu0 0
    %1255 = vmatpush2.bf16.msra.mxu0 0
    %1256 = vmatprep.subr.bf16.mxu0 0
    %1257 = vmatpush2.bf16.msra.mxu0 0
    %1258 = vmatprep.subr.bf16.mxu0 0
    %1259 = vmatpush2.bf16.msra.mxu0 0
    %1260 = vmatprep.mubr.bf16.mxu0 0
    %1261 = vmatmul.mubr.bf16.gmra.mxu0 %v1186
    %v1262 = vpop.f32.mrf.mxu0
    %v1263 = vadd.f32 %v117, %v1262
    %v1264 = vpop.f32.mrf.mxu0
    %v1265 = vadd.f32 %v118, %v1264
    %v1266 = vpop.f32.mrf.mxu0
    %v1267 = vpop.f32.mrf.mxu0
    %1268 = vdwg.mxu0
    %v1269 = vpack.c.bf16 %v1183, %v1183
    %1270 = vmatprep.subr.bf16.mxu0 %v487
    %1271 = vmatpush1.bf16.msra.mxu0 %v486
    %1272 = vmatprep.subr.bf16.mxu0 %v483
    %1273 = vmatpush1.bf16.msra.mxu0 %v482
    %1274 = vmatprep.subr.bf16.mxu0 %v479
    %1275 = vmatpush1.bf16.msra.mxu0 %v478
    %1276 = vmatprep.subr.bf16.mxu0 %v475
    %1277 = vmatpush1.bf16.msra.mxu0 %v474
    %1278 = vmatprep.subr.bf16.mxu0 %v471
    %1279 = vmatpush1.bf16.msra.mxu0 %v470
    %1280 = vmatprep.subr.bf16.mxu0 %v467
    %1281 = vmatpush1.bf16.msra.mxu0 %v466
    %1282 = vmatprep.subr.bf16.mxu0 %v463
    %1283 = vmatpush1.bf16.msra.mxu0 %v462
    %1284 = vmatprep.subr.bf16.mxu0 %v459
    %1285 = vmatpush1.bf16.msra.mxu0 %v458
    %1286 = vmatprep.subr.bf16.mxu0 0
    %1287 = vmatpush2.bf16.msra.mxu0 0
    %1288 = vmatprep.subr.bf16.mxu0 0
    %1289 = vmatpush2.bf16.msra.mxu0 0
    %1290 = vmatprep.subr.bf16.mxu0 0
    %1291 = vmatpush2.bf16.msra.mxu0 0
    %1292 = vmatprep.subr.bf16.mxu0 0
    %1293 = vmatpush2.bf16.msra.mxu0 0
    %1294 = vmatprep.subr.bf16.mxu0 0
    %1295 = vmatpush2.bf16.msra.mxu0 0
    %1296 = vmatprep.subr.bf16.mxu0 0
    %1297 = vmatpush2.bf16.msra.mxu0 0
    %1298 = vmatprep.subr.bf16.mxu0 0
    %1299 = vmatpush2.bf16.msra.mxu0 0
    %1300 = vmatprep.subr.bf16.mxu0 0
    %1301 = vmatpush2.bf16.msra.mxu0 0
    %1302 = vmatprep.mubr.bf16.mxu0 0
    %1303 = vmatmul.mubr.bf16.gmra.mxu0 %v1269
    %v1304 = vpop.f32.mrf.mxu0
    %v1305 = vadd.f32 0.0, %v1304
    %v1306 = vpop.f32.mrf.mxu0
    %v1307 = vadd.f32 0.0, %v1306
    %v1308 = vpop.f32.mrf.mxu0
    %v1309 = vpop.f32.mrf.mxu0
    %1310 = vdwg.mxu0
    %1311 = vmatprep.subr.bf16.mxu0 %v489
    %1312 = vmatpush1.bf16.msra.mxu0 %v488
    %1313 = vmatprep.subr.bf16.mxu0 %v485
    %1314 = vmatpush1.bf16.msra.mxu0 %v484
    %1315 = vmatprep.subr.bf16.mxu0 %v481
    %1316 = vmatpush1.bf16.msra.mxu0 %v480
    %1317 = vmatprep.subr.bf16.mxu0 %v477
    %1318 = vmatpush1.bf16.msra.mxu0 %v476
    %1319 = vmatprep.subr.bf16.mxu0 %v473
    %1320 = vmatpush1.bf16.msra.mxu0 %v472
    %1321 = vmatprep.subr.bf16.mxu0 %v469
    %1322 = vmatpush1.bf16.msra.mxu0 %v468
    %1323 = vmatprep.subr.bf16.mxu0 %v465
    %1324 = vmatpush1.bf16.msra.mxu0 %v464
    %1325 = vmatprep.subr.bf16.mxu0 %v461
    %1326 = vmatpush1.bf16.msra.mxu0 %v460
    %1327 = vmatprep.subr.bf16.mxu0 0
    %1328 = vmatpush2.bf16.msra.mxu0 0
    %1329 = vmatprep.subr.bf16.mxu0 0
    %1330 = vmatpush2.bf16.msra.mxu0 0
    %1331 = vmatprep.subr.bf16.mxu0 0
    %1332 = vmatpush2.bf16.msra.mxu0 0
    %1333 = vmatprep.subr.bf16.mxu0 0
    %1334 = vmatpush2.bf16.msra.mxu0 0
    %1335 = vmatprep.subr.bf16.mxu0 0
    %1336 = vmatpush2.bf16.msra.mxu0 0
    %1337 = vmatprep.subr.bf16.mxu0 0
    %1338 = vmatpush2.bf16.msra.mxu0 0
    %1339 = vmatprep.subr.bf16.mxu0 0
    %1340 = vmatpush2.bf16.msra.mxu0 0
    %1341 = vmatprep.subr.bf16.mxu0 0
    %1342 = vmatpush2.bf16.msra.mxu0 0
    %1343 = vmatprep.mubr.bf16.mxu0 0
    %1344 = vmatmul.mubr.bf16.gmra.mxu0 %v1269
    %v1345 = vpop.f32.mrf.mxu0
    %v1346 = vadd.f32 0.0, %v1345
    %v1347 = vpop.f32.mrf.mxu0
    %v1348 = vadd.f32 0.0, %v1347
    %v1349 = vpop.f32.mrf.mxu0
    %v1350 = vpop.f32.mrf.mxu0
    %1351 = vdwg.mxu0
    %v1352 = vadd.f32 %v1222, %v1305
    %v1353 = vadd.f32 %v1224, %v1307
    %v1354 = vadd.f32 %v1263, %v1346
    %v1355 = vadd.f32 %v1265, %v1348
    %v1356 = vtanh.pop %v1352
    %v1357 = vmul.f32 %v1356, 0.5
    %v1358 = vadd.f32 %v1357, 0.5
    %v1359 = vtanh.pop %v1353
    %v1360 = vmul.f32 %v1359, 0.5
    %v1361 = vadd.f32 %v1360, 0.5
    %v1362 = vtanh.pop %v1354
    %v1363 = vtanh.pop %v1355
    %v1364 = vmul.f32 %v1363, 0.5
    %v1365 = vadd.f32 %v1364, 0.5
    %v1366 = vmul.f32 %v1361, %v1181
    %v1367 = vmul.f32 %v1358, %v1362
    %v1368 = vadd.f32 %v1366, %v1367
    %v1369 = vtanh.pop %v1368
    %v1370 = vmul.f32 %v1365, %v1369
    %s1371 = scalar_lea.vmem %s0, 40
    %v1372 = vld [vmem:[%s1371] sm:$0xff]
    %v1373 = vpack.c.bf16 %v1372, %v1372
    %1374 = vmatprep.subr.bf16.mxu0 %v244
    %1375 = vmatpush1.bf16.msra.mxu0 %v243
    %1376 = vmatprep.subr.bf16.mxu0 %v240
    %1377 = vmatpush1.bf16.msra.mxu0 %v239
    %1378 = vmatprep.subr.bf16.mxu0 %v236
    %1379 = vmatpush1.bf16.msra.mxu0 %v235
    %1380 = vmatprep.subr.bf16.mxu0 %v232
    %1381 = vmatpush1.bf16.msra.mxu0 %v231
    %1382 = vmatprep.subr.bf16.mxu0 %v228
    %1383 = vmatpush1.bf16.msra.mxu0 %v227
    %1384 = vmatprep.subr.bf16.mxu0 %v224
    %1385 = vmatpush1.bf16.msra.mxu0 %v223
    %1386 = vmatprep.subr.bf16.mxu0 %v220
    %1387 = vmatpush1.bf16.msra.mxu0 %v219
    %1388 = vmatprep.subr.bf16.mxu0 %v216
    %1389 = vmatpush1.bf16.msra.mxu0 %v215
    %1390 = vmatprep.subr.bf16.mxu0 0
    %1391 = vmatpush2.bf16.msra.mxu0 0
    %1392 = vmatprep.subr.bf16.mxu0 0
    %1393 = vmatpush2.bf16.msra.mxu0 0
    %1394 = vmatprep.subr.bf16.mxu0 0
    %1395 = vmatpush2.bf16.msra.mxu0 0
    %1396 = vmatprep.subr.bf16.mxu0 0
    %1397 = vmatpush2.bf16.msra.mxu0 0
    %1398 = vmatprep.subr.bf16.mxu0 0
    %1399 = vmatpush2.bf16.msra.mxu0 0
    %1400 = vmatprep.subr.bf16.mxu0 0
    %1401 = vmatpush2.bf16.msra.mxu0 0
    %1402 = vmatprep.subr.bf16.mxu0 0
    %1403 = vmatpush2.bf16.msra.mxu0 0
    %1404 = vmatprep.subr.bf16.mxu0 0
    %1405 = vmatpush2.bf16.msra.mxu0 0
    %1406 = vmatprep.mubr.bf16.mxu0 0
    %1407 = vmatmul.mubr.bf16.gmra.mxu0 %v1373
    %v1408 = vpop.f32.mrf.mxu0
    %v1409 = vadd.f32 %v115, %v1408
    %v1410 = vpop.f32.mrf.mxu0
    %v1411 = vadd.f32 %v116, %v1410
    %v1412 = vpop.f32.mrf.mxu0
    %v1413 = vpop.f32.mrf.mxu0
    %1414 = vdwg.mxu0
    %1415 = vmatprep.subr.bf16.mxu0 %v246
    %1416 = vmatpush1.bf16.msra.mxu0 %v245
    %1417 = vmatprep.subr.bf16.mxu0 %v242
    %1418 = vmatpush1.bf16.msra.mxu0 %v241
    %1419 = vmatprep.subr.bf16.mxu0 %v238
    %1420 = vmatpush1.bf16.msra.mxu0 %v237
    %1421 = vmatprep.subr.bf16.mxu0 %v234
    %1422 = vmatpush1.bf16.msra.mxu0 %v233
    %1423 = vmatprep.subr.bf16.mxu0 %v230
    %1424 = vmatpush1.bf16.msra.mxu0 %v229
    %1425 = vmatprep.subr.bf16.mxu0 %v226
    %1426 = vmatpush1.bf16.msra.mxu0 %v225
    %1427 = vmatprep.subr.bf16.mxu0 %v222
    %1428 = vmatpush1.bf16.msra.mxu0 %v221
    %1429 = vmatprep.subr.bf16.mxu0 %v218
    %1430 = vmatpush1.bf16.msra.mxu0 %v217
    %1431 = vmatprep.subr.bf16.mxu0 0
    %1432 = vmatpush2.bf16.msra.mxu0 0
    %1433 = vmatprep.subr.bf16.mxu0 0
    %1434 = vmatpush2.bf16.msra.mxu0 0
    %1435 = vmatprep.subr.bf16.mxu0 0
    %1436 = vmatpush2.bf16.msra.mxu0 0
    %1437 = vmatprep.subr.bf16.mxu0 0
    %1438 = vmatpush2.bf16.msra.mxu0 0
    %1439 = vmatprep.subr.bf16.mxu0 0
    %1440 = vmatpush2.bf16.msra.mxu0 0
    %1441 = vmatprep.subr.bf16.mxu0 0
    %1442 = vmatpush2.bf16.msra.mxu0 0
    %1443 = vmatprep.subr.bf16.mxu0 0
    %1444 = vmatpush2.bf16.msra.mxu0 0
    %1445 = vmatprep.subr.bf16.mxu0 0
    %1446 = vmatpush2.bf16.msra.mxu0 0
    %1447 = vmatprep.mubr.bf16.mxu0 0
    %1448 = vmatmul.mubr.bf16.gmra.mxu0 %v1373
    %v1449 = vpop.f32.mrf.mxu0
    %v1450 = vadd.f32 %v117, %v1449
    %v1451 = vpop.f32.mrf.mxu0
    %v1452 = vadd.f32 %v118, %v1451
    %v1453 = vpop.f32.mrf.mxu0
    %v1454 = vpop.f32.mrf.mxu0
    %1455 = vdwg.mxu0
    %v1456 = vpack.c.bf16 %v1370, %v1370
    %1457 = vmatprep.subr.bf16.mxu0 %v487
    %1458 = vmatpush1.bf16.msra.mxu0 %v486
    %1459 = vmatprep.subr.bf16.mxu0 %v483
    %1460 = vmatpush1.bf16.msra.mxu0 %v482
    %1461 = vmatprep.subr.bf16.mxu0 %v479
    %1462 = vmatpush1.bf16.msra.mxu0 %v478
    %1463 = vmatprep.subr.bf16.mxu0 %v475
    %1464 = vmatpush1.bf16.msra.mxu0 %v474
    %1465 = vmatprep.subr.bf16.mxu0 %v471
    %1466 = vmatpush1.bf16.msra.mxu0 %v470
    %1467 = vmatprep.subr.bf16.mxu0 %v467
    %1468 = vmatpush1.bf16.msra.mxu0 %v466
    %1469 = vmatprep.subr.bf16.mxu0 %v463
    %1470 = vmatpush1.bf16.msra.mxu0 %v462
    %1471 = vmatprep.subr.bf16.mxu0 %v459
    %1472 = vmatpush1.bf16.msra.mxu0 %v458
    %1473 = vmatprep.subr.bf16.mxu0 0
    %1474 = vmatpush2.bf16.msra.mxu0 0
    %1475 = vmatprep.subr.bf16.mxu0 0
    %1476 = vmatpush2.bf16.msra.mxu0 0
    %1477 = vmatprep.subr.bf16.mxu0 0
    %1478 = vmatpush2.bf16.msra.mxu0 0
    %1479 = vmatprep.subr.bf16.mxu0 0
    %1480 = vmatpush2.bf16.msra.mxu0 0
    %1481 = vmatprep.subr.bf16.mxu0 0
    %1482 = vmatpush2.bf16.msra.mxu0 0
    %1483 = vmatprep.subr.bf16.mxu0 0
    %1484 = vmatpush2.bf16.msra.mxu0 0
    %1485 = vmatprep.subr.bf16.mxu0 0
    %1486 = vmatpush2.bf16.msra.mxu0 0
    %1487 = vmatprep.subr.bf16.mxu0 0
    %1488 = vmatpush2.bf16.msra.mxu0 0
    %1489 = vmatprep.mubr.bf16.mxu0 0
    %1490 = vmatmul.mubr.bf16.gmra.mxu0 %v1456
    %v1491 = vpop.f32.mrf.mxu0
    %v1492 = vadd.f32 0.0, %v1491
    %v1493 = vpop.f32.mrf.mxu0
    %v1494 = vadd.f32 0.0, %v1493
    %v1495 = vpop.f32.mrf.mxu0
    %v1496 = vpop.f32.mrf.mxu0
    %1497 = vdwg.mxu0
    %1498 = vmatprep.subr.bf16.mxu0 %v489
    %1499 = vmatpush1.bf16.msra.mxu0 %v488
    %1500 = vmatprep.subr.bf16.mxu0 %v485
    %1501 = vmatpush1.bf16.msra.mxu0 %v484
    %1502 = vmatprep.subr.bf16.mxu0 %v481
    %1503 = vmatpush1.bf16.msra.mxu0 %v480
    %1504 = vmatprep.subr.bf16.mxu0 %v477
    %1505 = vmatpush1.bf16.msra.mxu0 %v476
    %1506 = vmatprep.subr.bf16.mxu0 %v473
    %1507 = vmatpush1.bf16.msra.mxu0 %v472
    %1508 = vmatprep.subr.bf16.mxu0 %v469
    %1509 = vmatpush1.bf16.msra.mxu0 %v468
    %1510 = vmatprep.subr.bf16.mxu0 %v465
    %1511 = vmatpush1.bf16.msra.mxu0 %v464
    %1512 = vmatprep.subr.bf16.mxu0 %v461
    %1513 = vmatpush1.bf16.msra.mxu0 %v460
    %1514 = vmatprep.subr.bf16.mxu0 0
    %1515 = vmatpush2.bf16.msra.mxu0 0
    %1516 = vmatprep.subr.bf16.mxu0 0
    %1517 = vmatpush2.bf16.msra.mxu0 0
    %1518 = vmatprep.subr.bf16.mxu0 0
    %1519 = vmatpush2.bf16.msra.mxu0 0
    %1520 = vmatprep.subr.bf16.mxu0 0
    %1521 = vmatpush2.bf16.msra.mxu0 0
    %1522 = vmatprep.subr.bf16.mxu0 0
    %1523 = vmatpush2.bf16.msra.mxu0 0
    %1524 = vmatprep.subr.bf16.mxu0 0
    %1525 = vmatpush2.bf16.msra.mxu0 0
    %1526 = vmatprep.subr.bf16.mxu0 0
    %1527 = vmatpush2.bf16.msra.mxu0 0
    %1528 = vmatprep.subr.bf16.mxu0 0
    %1529 = vmatpush2.bf16.msra.mxu0 0
    %1530 = vmatprep.mubr.bf16.mxu0 0
    %1531 = vmatmul.mubr.bf16.gmra.mxu0 %v1456
    %v1532 = vpop.f32.mrf.mxu0
    %v1533 = vadd.f32 0.0, %v1532
    %v1534 = vpop.f32.mrf.mxu0
    %v1535 = vadd.f32 0.0, %v1534
    %v1536 = vpop.f32.mrf.mxu0
    %v1537 = vpop.f32.mrf.mxu0
    %1538 = vdwg.mxu0
    %v1539 = vadd.f32 %v1409, %v1492
    %v1540 = vadd.f32 %v1411, %v1494
    %v1541 = vadd.f32 %v1450, %v1533
    %v1542 = vadd.f32 %v1452, %v1535
    %v1543 = vtanh.pop %v1539
    %v1544 = vmul.f32 %v1543, 0.5
    %v1545 = vadd.f32 %v1544, 0.5
    %v1546 = vtanh.pop %v1540
    %v1547 = vmul.f32 %v1546, 0.5
    %v1548 = vadd.f32 %v1547, 0.5
    %v1549 = vtanh.pop %v1541
    %v1550 = vtanh.pop %v1542
    %v1551 = vmul.f32 %v1550, 0.5
    %v1552 = vadd.f32 %v1551, 0.5
    %v1553 = vmul.f32 %v1548, %v1368
    %v1554 = vmul.f32 %v1545, %v1549
    %v1555 = vadd.f32 %v1553, %v1554
    %v1556 = vtanh.pop %v1555
    %v1557 = vmul.f32 %v1552, %v1556
    %s1558 = scalar_lea.vmem %s0, 48
    %v1559 = vld [vmem:[%s1558] sm:$0xff]
    %v1560 = vpack.c.bf16 %v1559, %v1559
    %1561 = vmatprep.subr.bf16.mxu0 %v244
    %1562 = vmatpush1.bf16.msra.mxu0 %v243
    %1563 = vmatprep.subr.bf16.mxu0 %v240
    %1564 = vmatpush1.bf16.msra.mxu0 %v239
    %1565 = vmatprep.subr.bf16.mxu0 %v236
    %1566 = vmatpush1.bf16.msra.mxu0 %v235
    %1567 = vmatprep.subr.bf16.mxu0 %v232
    %1568 = vmatpush1.bf16.msra.mxu0 %v231
    %1569 = vmatprep.subr.bf16.mxu0 %v228
    %1570 = vmatpush1.bf16.msra.mxu0 %v227
    %1571 = vmatprep.subr.bf16.mxu0 %v224
    %1572 = vmatpush1.bf16.msra.mxu0 %v223
    %1573 = vmatprep.subr.bf16.mxu0 %v220
    %1574 = vmatpush1.bf16.msra.mxu0 %v219
    %1575 = vmatprep.subr.bf16.mxu0 %v216
    %1576 = vmatpush1.bf16.msra.mxu0 %v215
    %1577 = vmatprep.subr.bf16.mxu0 0
    %1578 = vmatpush2.bf16.msra.mxu0 0
    %1579 = vmatprep.subr.bf16.mxu0 0
    %1580 = vmatpush2.bf16.msra.mxu0 0
    %1581 = vmatprep.subr.bf16.mxu0 0
    %1582 = vmatpush2.bf16.msra.mxu0 0
    %1583 = vmatprep.subr.bf16.mxu0 0
    %1584 = vmatpush2.bf16.msra.mxu0 0
    %1585 = vmatprep.subr.bf16.mxu0 0
    %1586 = vmatpush2.bf16.msra.mxu0 0
    %1587 = vmatprep.subr.bf16.mxu0 0
    %1588 = vmatpush2.bf16.msra.mxu0 0
    %1589 = vmatprep.subr.bf16.mxu0 0
    %1590 = vmatpush2.bf16.msra.mxu0 0
    %1591 = vmatprep.subr.bf16.mxu0 0
    %1592 = vmatpush2.bf16.msra.mxu0 0
    %1593 = vmatprep.mubr.bf16.mxu0 0
    %1594 = vmatmul.mubr.bf16.gmra.mxu0 %v1560
    %v1595 = vpop.f32.mrf.mxu0
    %v1596 = vadd.f32 %v115, %v1595
    %v1597 = vpop.f32.mrf.mxu0
    %v1598 = vadd.f32 %v116, %v1597
    %v1599 = vpop.f32.mrf.mxu0
    %v1600 = vpop.f32.mrf.mxu0
    %1601 = vdwg.mxu0
    %1602 = vmatprep.subr.bf16.mxu0 %v246
    %1603 = vmatpush1.bf16.msra.mxu0 %v245
    %1604 = vmatprep.subr.bf16.mxu0 %v242
    %1605 = vmatpush1.bf16.msra.mxu0 %v241
    %1606 = vmatprep.subr.bf16.mxu0 %v238
    %1607 = vmatpush1.bf16.msra.mxu0 %v237
    %1608 = vmatprep.subr.bf16.mxu0 %v234
    %1609 = vmatpush1.bf16.msra.mxu0 %v233
    %1610 = vmatprep.subr.bf16.mxu0 %v230
    %1611 = vmatpush1.bf16.msra.mxu0 %v229
    %1612 = vmatprep.subr.bf16.mxu0 %v226
    %1613 = vmatpush1.bf16.msra.mxu0 %v225
    %1614 = vmatprep.subr.bf16.mxu0 %v222
    %1615 = vmatpush1.bf16.msra.mxu0 %v221
    %1616 = vmatprep.subr.bf16.mxu0 %v218
    %1617 = vmatpush1.bf16.msra.mxu0 %v217
    %1618 = vmatprep.subr.bf16.mxu0 0
    %1619 = vmatpush2.bf16.msra.mxu0 0
    %1620 = vmatprep.subr.bf16.mxu0 0
    %1621 = vmatpush2.bf16.msra.mxu0 0
    %1622 = vmatprep.subr.bf16.mxu0 0
    %1623 = vmatpush2.bf16.msra.mxu0 0
    %1624 = vmatprep.subr.bf16.mxu0 0
    %1625 = vmatpush2.bf16.msra.mxu0 0
    %1626 = vmatprep.subr.bf16.mxu0 0
    %1627 = vmatpush2.bf16.msra.mxu0 0
    %1628 = vmatprep.subr.bf16.mxu0 0
    %1629 = vmatpush2.bf16.msra.mxu0 0
    %1630 = vmatprep.subr.bf16.mxu0 0
    %1631 = vmatpush2.bf16.msra.mxu0 0
    %1632 = vmatprep.subr.bf16.mxu0 0
    %1633 = vmatpush2.bf16.msra.mxu0 0
    %1634 = vmatprep.mubr.bf16.mxu0 0
    %1635 = vmatmul.mubr.bf16.gmra.mxu0 %v1560
    %v1636 = vpop.f32.mrf.mxu0
    %v1637 = vadd.f32 %v117, %v1636
    %v1638 = vpop.f32.mrf.mxu0
    %v1639 = vadd.f32 %v118, %v1638
    %v1640 = vpop.f32.mrf.mxu0
    %v1641 = vpop.f32.mrf.mxu0
    %1642 = vdwg.mxu0
    %v1643 = vpack.c.bf16 %v1557, %v1557
    %1644 = vmatprep.subr.bf16.mxu0 %v487
    %1645 = vmatpush1.bf16.msra.mxu0 %v486
    %1646 = vmatprep.subr.bf16.mxu0 %v483
    %1647 = vmatpush1.bf16.msra.mxu0 %v482
    %1648 = vmatprep.subr.bf16.mxu0 %v479
    %1649 = vmatpush1.bf16.msra.mxu0 %v478
    %1650 = vmatprep.subr.bf16.mxu0 %v475
    %1651 = vmatpush1.bf16.msra.mxu0 %v474
    %1652 = vmatprep.subr.bf16.mxu0 %v471
    %1653 = vmatpush1.bf16.msra.mxu0 %v470
    %1654 = vmatprep.subr.bf16.mxu0 %v467
    %1655 = vmatpush1.bf16.msra.mxu0 %v466
    %1656 = vmatprep.subr.bf16.mxu0 %v463
    %1657 = vmatpush1.bf16.msra.mxu0 %v462
    %1658 = vmatprep.subr.bf16.mxu0 %v459
    %1659 = vmatpush1.bf16.msra.mxu0 %v458
    %1660 = vmatprep.subr.bf16.mxu0 0
    %1661 = vmatpush2.bf16.msra.mxu0 0
    %1662 = vmatprep.subr.bf16.mxu0 0
    %1663 = vmatpush2.bf16.msra.mxu0 0
    %1664 = vmatprep.subr.bf16.mxu0 0
    %1665 = vmatpush2.bf16.msra.mxu0 0
    %1666 = vmatprep.subr.bf16.mxu0 0
    %1667 = vmatpush2.bf16.msra.mxu0 0
    %1668 = vmatprep.subr.bf16.mxu0 0
    %1669 = vmatpush2.bf16.msra.mxu0 0
    %1670 = vmatprep.subr.bf16.mxu0 0
    %1671 = vmatpush2.bf16.msra.mxu0 0
    %1672 = vmatprep.subr.bf16.mxu0 0
    %1673 = vmatpush2.bf16.msra.mxu0 0
    %1674 = vmatprep.subr.bf16.mxu0 0
    %1675 = vmatpush2.bf16.msra.mxu0 0
    %1676 = vmatprep.mubr.bf16.mxu0 0
    %1677 = vmatmul.mubr.bf16.gmra.mxu0 %v1643
    %v1678 = vpop.f32.mrf.mxu0
    %v1679 = vadd.f32 0.0, %v1678
    %v1680 = vpop.f32.mrf.mxu0
    %v1681 = vadd.f32 0.0, %v1680
    %v1682 = vpop.f32.mrf.mxu0
    %v1683 = vpop.f32.mrf.mxu0
    %1684 = vdwg.mxu0
    %1685 = vmatprep.subr.bf16.mxu0 %v489
    %1686 = vmatpush1.bf16.msra.mxu0 %v488
    %1687 = vmatprep.subr.bf16.mxu0 %v485
    %1688 = vmatpush1.bf16.msra.mxu0 %v484
    %1689 = vmatprep.subr.bf16.mxu0 %v481
    %1690 = vmatpush1.bf16.msra.mxu0 %v480
    %1691 = vmatprep.subr.bf16.mxu0 %v477
    %1692 = vmatpush1.bf16.msra.mxu0 %v476
    %1693 = vmatprep.subr.bf16.mxu0 %v473
    %1694 = vmatpush1.bf16.msra.mxu0 %v472
    %1695 = vmatprep.subr.bf16.mxu0 %v469
    %1696 = vmatpush1.bf16.msra.mxu0 %v468
    %1697 = vmatprep.subr.bf16.mxu0 %v465
    %1698 = vmatpush1.bf16.msra.mxu0 %v464
    %1699 = vmatprep.subr.bf16.mxu0 %v461
    %1700 = vmatpush1.bf16.msra.mxu0 %v460
    %1701 = vmatprep.subr.bf16.mxu0 0
    %1702 = vmatpush2.bf16.msra.mxu0 0
    %1703 = vmatprep.subr.bf16.mxu0 0
    %1704 = vmatpush2.bf16.msra.mxu0 0
    %1705 = vmatprep.subr.bf16.mxu0 0
    %1706 = vmatpush2.bf16.msra.mxu0 0
    %1707 = vmatprep.subr.bf16.mxu0 0
    %1708 = vmatpush2.bf16.msra.mxu0 0
    %1709 = vmatprep.subr.bf16.mxu0 0
    %1710 = vmatpush2.bf16.msra.mxu0 0
    %1711 = vmatprep.subr.bf16.mxu0 0
    %1712 = vmatpush2.bf16.msra.mxu0 0
    %1713 = vmatprep.subr.bf16.mxu0 0
    %1714 = vmatpush2.bf16.msra.mxu0 0
    %1715 = vmatprep.subr.bf16.mxu0 0
    %1716 = vmatpush2.bf16.msra.mxu0 0
    %1717 = vmatprep.mubr.bf16.mxu0 0
    %1718 = vmatmul.mubr.bf16.gmra.mxu0 %v1643
    %v1719 = vpop.f32.mrf.mxu0
    %v1720 = vadd.f32 0.0, %v1719
    %v1721 = vpop.f32.mrf.mxu0
    %v1722 = vadd.f32 0.0, %v1721
    %v1723 = vpop.f32.mrf.mxu0
    %v1724 = vpop.f32.mrf.mxu0
    %1725 = vdwg.mxu0
    %v1726 = vadd.f32 %v1596, %v1679
    %v1727 = vadd.f32 %v1598, %v1681
    %v1728 = vadd.f32 %v1637, %v1720
    %v1729 = vadd.f32 %v1639, %v1722
    %v1730 = vtanh.pop %v1726
    %v1731 = vmul.f32 %v1730, 0.5
    %v1732 = vadd.f32 %v1731, 0.5
    %v1733 = vtanh.pop %v1727
    %v1734 = vmul.f32 %v1733, 0.5
    %v1735 = vadd.f32 %v1734, 0.5
    %v1736 = vtanh.pop %v1728
    %v1737 = vtanh.pop %v1729
    %v1738 = vmul.f32 %v1737, 0.5
    %v1739 = vadd.f32 %v1738, 0.5
    %v1740 = vmul.f32 %v1735, %v1555
    %v1741 = vmul.f32 %v1732, %v1736
    %v1742 = vadd.f32 %v1740, %v1741
    %v1743 = vtanh.pop %v1742
    %v1744 = vmul.f32 %v1739, %v1743
    %s1745 = scalar_lea.vmem %s0, 56
    %v1746 = vld [vmem:[%s1745] sm:$0xff]
    %v1747 = vpack.c.bf16 %v1746, %v1746
    %1748 = vmatprep.subr.bf16.mxu0 %v244
    %1749 = vmatpush1.bf16.msra.mxu0 %v243
    %1750 = vmatprep.subr.bf16.mxu0 %v240
    %1751 = vmatpush1.bf16.msra.mxu0 %v239
    %1752 = vmatprep.subr.bf16.mxu0 %v236
    %1753 = vmatpush1.bf16.msra.mxu0 %v235
    %1754 = vmatprep.subr.bf16.mxu0 %v232
    %1755 = vmatpush1.bf16.msra.mxu0 %v231
    %1756 = vmatprep.subr.bf16.mxu0 %v228
    %1757 = vmatpush1.bf16.msra.mxu0 %v227
    %1758 = vmatprep.subr.bf16.mxu0 %v224
    %1759 = vmatpush1.bf16.msra.mxu0 %v223
    %1760 = vmatprep.subr.bf16.mxu0 %v220
    %1761 = vmatpush1.bf16.msra.mxu0 %v219
    %1762 = vmatprep.subr.bf16.mxu0 %v216
    %1763 = vmatpush1.bf16.msra.mxu0 %v215
    %1764 = vmatprep.subr.bf16.mxu0 0
    %1765 = vmatpush2.bf16.msra.mxu0 0
    %1766 = vmatprep.subr.bf16.mxu0 0
    %1767 = vmatpush2.bf16.msra.mxu0 0
    %1768 = vmatprep.subr.bf16.mxu0 0
    %1769 = vmatpush2.bf16.msra.mxu0 0
    %1770 = vmatprep.subr.bf16.mxu0 0
    %1771 = vmatpush2.bf16.msra.mxu0 0
    %1772 = vmatprep.subr.bf16.mxu0 0
    %1773 = vmatpush2.bf16.msra.mxu0 0
    %1774 = vmatprep.subr.bf16.mxu0 0
    %1775 = vmatpush2.bf16.msra.mxu0 0
    %1776 = vmatprep.subr.bf16.mxu0 0
    %1777 = vmatpush2.bf16.msra.mxu0 0
    %1778 = vmatprep.subr.bf16.mxu0 0
    %1779 = vmatpush2.bf16.msra.mxu0 0
    %1780 = vmatprep.mubr.bf16.mxu0 0
    %1781 = vmatmul.mubr.bf16.gmra.mxu0 %v1747
    %v1782 = vpop.f32.mrf.mxu0
    %v1783 = vadd.f32 %v115, %v1782
    %v1784 = vpop.f32.mrf.mxu0
    %v1785 = vadd.f32 %v116, %v1784
    %v1786 = vpop.f32.mrf.mxu0
    %v1787 = vpop.f32.mrf.mxu0
    %1788 = vdwg.mxu0
    %1789 = vmatprep.subr.bf16.mxu0 %v246
    %1790 = vmatpush1.bf16.msra.mxu0 %v245
    %1791 = vmatprep.subr.bf16.mxu0 %v242
    %1792 = vmatpush1.bf16.msra.mxu0 %v241
    %1793 = vmatprep.subr.bf16.mxu0 %v238
    %1794 = vmatpush1.bf16.msra.mxu0 %v237
    %1795 = vmatprep.subr.bf16.mxu0 %v234
    %1796 = vmatpush1.bf16.msra.mxu0 %v233
    %1797 = vmatprep.subr.bf16.mxu0 %v230
    %1798 = vmatpush1.bf16.msra.mxu0 %v229
    %1799 = vmatprep.subr.bf16.mxu0 %v226
    %1800 = vmatpush1.bf16.msra.mxu0 %v225
    %1801 = vmatprep.subr.bf16.mxu0 %v222
    %1802 = vmatpush1.bf16.msra.mxu0 %v221
    %1803 = vmatprep.subr.bf16.mxu0 %v218
    %1804 = vmatpush1.bf16.msra.mxu0 %v217
    %1805 = vmatprep.subr.bf16.mxu0 0
    %1806 = vmatpush2.bf16.msra.mxu0 0
    %1807 = vmatprep.subr.bf16.mxu0 0
    %1808 = vmatpush2.bf16.msra.mxu0 0
    %1809 = vmatprep.subr.bf16.mxu0 0
    %1810 = vmatpush2.bf16.msra.mxu0 0
    %1811 = vmatprep.subr.bf16.mxu0 0
    %1812 = vmatpush2.bf16.msra.mxu0 0
    %1813 = vmatprep.subr.bf16.mxu0 0
    %1814 = vmatpush2.bf16.msra.mxu0 0
    %1815 = vmatprep.subr.bf16.mxu0 0
    %1816 = vmatpush2.bf16.msra.mxu0 0
    %1817 = vmatprep.subr.bf16.mxu0 0
    %1818 = vmatpush2.bf16.msra.mxu0 0
    %1819 = vmatprep.subr.bf16.mxu0 0
    %1820 = vmatpush2.bf16.msra.mxu0 0
    %1821 = vmatprep.mubr.bf16.mxu0 0
    %1822 = vmatmul.mubr.bf16.gmra.mxu0 %v1747
    %v1823 = vpop.f32.mrf.mxu0
    %v1824 = vadd.f32 %v117, %v1823
    %v1825 = vpop.f32.mrf.mxu0
    %v1826 = vadd.f32 %v118, %v1825
    %v1827 = vpop.f32.mrf.mxu0
    %v1828 = vpop.f32.mrf.mxu0
    %1829 = vdwg.mxu0
    %v1830 = vpack.c.bf16 %v1744, %v1744
    %1831 = vmatprep.subr.bf16.mxu0 %v487
    %1832 = vmatpush1.bf16.msra.mxu0 %v486
    %1833 = vmatprep.subr.bf16.mxu0 %v483
    %1834 = vmatpush1.bf16.msra.mxu0 %v482
    %1835 = vmatprep.subr.bf16.mxu0 %v479
    %1836 = vmatpush1.bf16.msra.mxu0 %v478
    %1837 = vmatprep.subr.bf16.mxu0 %v475
    %1838 = vmatpush1.bf16.msra.mxu0 %v474
    %1839 = vmatprep.subr.bf16.mxu0 %v471
    %1840 = vmatpush1.bf16.msra.mxu0 %v470
    %1841 = vmatprep.subr.bf16.mxu0 %v467
    %1842 = vmatpush1.bf16.msra.mxu0 %v466
    %1843 = vmatprep.subr.bf16.mxu0 %v463
    %1844 = vmatpush1.bf16.msra.mxu0 %v462
    %1845 = vmatprep.subr.bf16.mxu0 %v459
    %1846 = vmatpush1.bf16.msra.mxu0 %v458
    %1847 = vmatprep.subr.bf16.mxu0 0
    %1848 = vmatpush2.bf16.msra.mxu0 0
    %1849 = vmatprep.subr.bf16.mxu0 0
    %1850 = vmatpush2.bf16.msra.mxu0 0
    %1851 = vmatprep.subr.bf16.mxu0 0
    %1852 = vmatpush2.bf16.msra.mxu0 0
    %1853 = vmatprep.subr.bf16.mxu0 0
    %1854 = vmatpush2.bf16.msra.mxu0 0
    %1855 = vmatprep.subr.bf16.mxu0 0
    %1856 = vmatpush2.bf16.msra.mxu0 0
    %1857 = vmatprep.subr.bf16.mxu0 0
    %1858 = vmatpush2.bf16.msra.mxu0 0
    %1859 = vmatprep.subr.bf16.mxu0 0
    %1860 = vmatpush2.bf16.msra.mxu0 0
    %1861 = vmatprep.subr.bf16.mxu0 0
    %1862 = vmatpush2.bf16.msra.mxu0 0
    %1863 = vmatprep.mubr.bf16.mxu0 0
    %1864 = vmatmul.mubr.bf16.gmra.mxu0 %v1830
    %v1865 = vpop.f32.mrf.mxu0
    %v1866 = vadd.f32 0.0, %v1865
    %v1867 = vpop.f32.mrf.mxu0
    %v1868 = vadd.f32 0.0, %v1867
    %v1869 = vpop.f32.mrf.mxu0
    %v1870 = vpop.f32.mrf.mxu0
    %1871 = vdwg.mxu0
    %1872 = vmatprep.subr.bf16.mxu0 %v489
    %1873 = vmatpush1.bf16.msra.mxu0 %v488
    %1874 = vmatprep.subr.bf16.mxu0 %v485
    %1875 = vmatpush1.bf16.msra.mxu0 %v484
    %1876 = vmatprep.subr.bf16.mxu0 %v481
    %1877 = vmatpush1.bf16.msra.mxu0 %v480
    %1878 = vmatprep.subr.bf16.mxu0 %v477
    %1879 = vmatpush1.bf16.msra.mxu0 %v476
    %1880 = vmatprep.subr.bf16.mxu0 %v473
    %1881 = vmatpush1.bf16.msra.mxu0 %v472
    %1882 = vmatprep.subr.bf16.mxu0 %v469
    %1883 = vmatpush1.bf16.msra.mxu0 %v468
    %1884 = vmatprep.subr.bf16.mxu0 %v465
    %1885 = vmatpush1.bf16.msra.mxu0 %v464
    %1886 = vmatprep.subr.bf16.mxu0 %v461
    %1887 = vmatpush1.bf16.msra.mxu0 %v460
    %1888 = vmatprep.subr.bf16.mxu0 0
    %1889 = vmatpush2.bf16.msra.mxu0 0
    %1890 = vmatprep.subr.bf16.mxu0 0
    %1891 = vmatpush2.bf16.msra.mxu0 0
    %1892 = vmatprep.subr.bf16.mxu0 0
    %1893 = vmatpush2.bf16.msra.mxu0 0
    %1894 = vmatprep.subr.bf16.mxu0 0
    %1895 = vmatpush2.bf16.msra.mxu0 0
    %1896 = vmatprep.subr.bf16.mxu0 0
    %1897 = vmatpush2.bf16.msra.mxu0 0
    %1898 = vmatprep.subr.bf16.mxu0 0
    %1899 = vmatpush2.bf16.msra.mxu0 0
    %1900 = vmatprep.subr.bf16.mxu0 0
    %1901 = vmatpush2.bf16.msra.mxu0 0
    %1902 = vmatprep.subr.bf16.mxu0 0
    %1903 = vmatpush2.bf16.msra.mxu0 0
    %1904 = vmatprep.mubr.bf16.mxu0 0
    %1905 = vmatmul.mubr.bf16.gmra.mxu0 %v1830
    %v1906 = vpop.f32.mrf.mxu0
    %v1907 = vadd.f32 0.0, %v1906
    %v1908 = vpop.f32.mrf.mxu0
    %v1909 = vadd.f32 0.0, %v1908
    %v1910 = vpop.f32.mrf.mxu0
    %v1911 = vpop.f32.mrf.mxu0
    %1912 = vdwg.mxu0
    %v1913 = vadd.f32 %v1783, %v1866
    %v1914 = vadd.f32 %v1785, %v1868
    %v1915 = vadd.f32 %v1824, %v1907
    %v1916 = vadd.f32 %v1826, %v1909
    %v1917 = vtanh.pop %v1913
    %v1918 = vmul.f32 %v1917, 0.5
    %v1919 = vadd.f32 %v1918, 0.5
    %v1920 = vtanh.pop %v1914
    %v1921 = vmul.f32 %v1920, 0.5
    %v1922 = vadd.f32 %v1921, 0.5
    %v1923 = vtanh.pop %v1915
    %v1924 = vtanh.pop %v1916
    %v1925 = vmul.f32 %v1924, 0.5
    %v1926 = vadd.f32 %v1925, 0.5
    %v1927 = vmul.f32 %v1922, %v1742
    %v1928 = vmul.f32 %v1919, %v1923
    %v1929 = vadd.f32 %v1927, %v1928
    %v1930 = vtanh.pop %v1929
    %v1931 = vmul.f32 %v1926, %v1930
    %v1932 = vpack.c.bf16 %v1931, %v1931
    %v1933 = vld [vmem:[%s6] sm:$0xf]
    %v1934 = vld [vmem:[%s6 + $0x4] sm:$0xf]
    %v1935 = vld [vmem:[%s6 + $0x8] sm:$0xf]
    %v1936 = vld [vmem:[%s6 + $0xc] sm:$0xf]
    %v1937 = vld [vmem:[%s6 + $0x10] sm:$0xf]
    %v1938 = vld [vmem:[%s6 + $0x14] sm:$0xf]
    %v1939 = vld [vmem:[%s6 + $0x18] sm:$0xf]
    %v1940 = vld [vmem:[%s6 + $0x1c] sm:$0xf]
    %v1941 = vld [vmem:[%s6 + $0x20] sm:$0xf]
    %v1942 = vld [vmem:[%s6 + $0x24] sm:$0xf]
    %v1943 = vld [vmem:[%s6 + $0x28] sm:$0xf]
    %v1944 = vld [vmem:[%s6 + $0x2c] sm:$0xf]
    %v1945 = vld [vmem:[%s6 + $0x30] sm:$0xf]
    %v1946 = vld [vmem:[%s6 + $0x34] sm:$0xf]
    %v1947 = vld [vmem:[%s6 + $0x38] sm:$0xf]
    %v1948 = vld [vmem:[%s6 + $0x3c] sm:$0xf]
    %v1949 = vld [vmem:[%s7] sm:$0x1]
    %v1951 = vlaneseq
    %v1952 = vshrl.u32 %v1951, 7
    %v1953 = vsub.s32 0, %v1952
    %v1954 = vrot.slane %v1949, %v1953
    %v1972 = vunpack.c.l.b16 %v1933
    %v1973 = vunpack.c.l.b16 %v1934
    %v1974 = vunpack.c.l.b16 %v1935
    %v1975 = vunpack.c.l.b16 %v1936
    %v1976 = vunpack.c.l.b16 %v1937
    %v1977 = vunpack.c.l.b16 %v1938
    %v1978 = vunpack.c.l.b16 %v1939
    %v1979 = vunpack.c.l.b16 %v1940
    %v1980 = vunpack.c.l.b16 %v1941
    %v1981 = vunpack.c.l.b16 %v1942
    %v1982 = vunpack.c.l.b16 %v1943
    %v1983 = vunpack.c.l.b16 %v1944
    %v1984 = vunpack.c.l.b16 %v1945
    %v1985 = vunpack.c.l.b16 %v1946
    %v1986 = vunpack.c.l.b16 %v1947
    %v1987 = vunpack.c.l.b16 %v1948
    %v1988 = vpack.c.b16 %v1973, %v1972
    %v1989 = vpack.c.b16 %v1975, %v1974
    %v1990 = vpack.c.b16 %v1977, %v1976
    %v1991 = vpack.c.b16 %v1979, %v1978
    %v1992 = vpack.c.b16 %v1981, %v1980
    %v1993 = vpack.c.b16 %v1983, %v1982
    %v1994 = vpack.c.b16 %v1985, %v1984
    %v1995 = vpack.c.b16 %v1987, %v1986
    %2004 = vmatprep.subr.bf16.mxu0 0
    %2005 = vmatpush1.bf16.msra.mxu0 %v1995
    %2006 = vmatprep.subr.bf16.mxu0 0
    %2007 = vmatpush1.bf16.msra.mxu0 %v1994
    %2008 = vmatprep.subr.bf16.mxu0 0
    %2009 = vmatpush1.bf16.msra.mxu0 %v1993
    %2010 = vmatprep.subr.bf16.mxu0 0
    %2011 = vmatpush1.bf16.msra.mxu0 %v1992
    %2012 = vmatprep.subr.bf16.mxu0 0
    %2013 = vmatpush1.bf16.msra.mxu0 %v1991
    %2014 = vmatprep.subr.bf16.mxu0 0
    %2015 = vmatpush1.bf16.msra.mxu0 %v1990
    %2016 = vmatprep.subr.bf16.mxu0 0
    %2017 = vmatpush1.bf16.msra.mxu0 %v1989
    %2018 = vmatprep.subr.bf16.mxu0 0
    %2019 = vmatpush1.bf16.msra.mxu0 %v1988
    %2020 = vmatprep.subr.bf16.mxu0 0
    %2021 = vmatpush2.bf16.msra.mxu0 0
    %2022 = vmatprep.subr.bf16.mxu0 0
    %2023 = vmatpush2.bf16.msra.mxu0 0
    %2024 = vmatprep.subr.bf16.mxu0 0
    %2025 = vmatpush2.bf16.msra.mxu0 0
    %2026 = vmatprep.subr.bf16.mxu0 0
    %2027 = vmatpush2.bf16.msra.mxu0 0
    %2028 = vmatprep.subr.bf16.mxu0 0
    %2029 = vmatpush2.bf16.msra.mxu0 0
    %2030 = vmatprep.subr.bf16.mxu0 0
    %2031 = vmatpush2.bf16.msra.mxu0 0
    %2032 = vmatprep.subr.bf16.mxu0 0
    %2033 = vmatpush2.bf16.msra.mxu0 0
    %2034 = vmatprep.subr.bf16.mxu0 0
    %2035 = vmatpush2.bf16.msra.mxu0 0
    %2036 = vmatprep.mubr.bf16.mxu0 0
    %2037 = vmatmul.mubr.bf16.gmra.mxu0 %v1932
    %v2038 = vpop.f32.mrf.mxu0
    %v2039 = vadd.f32 %v1954, %v2038
    %v2040 = vpop.f32.mrf.mxu0
    %v2041 = vpop.f32.mrf.mxu0
    %v2042 = vpop.f32.mrf.mxu0
    %2043 = vdwg.mxu0
    %2044 = vst [vmem:[%s8] sm:$0xff] %v2039
    %2045 = vst [vmem:[%s9] sm:$0xff] %v1931
    %2046 = vst [vmem:[%s10] sm:$0xff] %v1929
    // Predicated region
    $region38: #{_lambda_.1} parent=1 // pred_check
      _
    $region39: #{_lambda_.1} parent=1 // pred_check_branch
      %2048 = sbr.rel (0) target = $region41
    $region40: #{_lambda_.1} parent=1 // pred_region
      _
    $region41: #{_lambda_.1} parent=1 // pred_fallthru
      _
    // Predicated region
    $region42: #{_lambda_.1} parent=1 // pred_check
      _
    $region43: #{_lambda_.1} parent=1 // pred_check_branch
      %2050 = sbr.rel (0) target = $region45
    $region44: #{_lambda_.1} parent=1 // pred_region
      _
    $region45: #{_lambda_.1} parent=1 // pred_fallthru
      _
    // Predicated region
    $region46: #{_lambda_.1} parent=1 // pred_check
      _
    $region47: #{_lambda_.1} parent=1 // pred_check_branch
      %2052 = sbr.rel (0) target = $region49
    $region48: #{_lambda_.1} parent=1 // pred_region
      _
    $region49: #{_lambda_.1} parent=1 // pred_fallthru
      _
    // Predicated region
    $region50: #{_lambda_.1} parent=1 // pred_check
      _
    $region51: #{_lambda_.1} parent=1 // pred_check_branch
      %2054 = sbr.rel (0) target = $region53
    $region52: #{_lambda_.1} parent=1 // pred_region
      _
    $region53: #{_lambda_.1} parent=1 // pred_fallthru
      _
    // Predicated region
    $region54: #{_lambda_.1} parent=1 // pred_check
      _
    $region55: #{_lambda_.1} parent=1 // pred_check_branch
      %2056 = sbr.rel (0) target = $region57
    $region56: #{_lambda_.1} parent=1 // pred_region
      _
    $region57: #{_lambda_.1} parent=1 // pred_fallthru
      _
    // Predicated region
    $region58: #{_lambda_.1} parent=1 // pred_check
      _
    $region59: #{_lambda_.1} parent=1 // pred_check_branch
      %2058 = sbr.rel (0) target = $region61
    $region60: #{_lambda_.1} parent=1 // pred_region
      _
    $region61: #{_lambda_.1} parent=1 // pred_fallthru
      _
    %2059 = vsyncpa [#allocation3], 1

</llo_original>
